<compile_context>
chip_gen: v7x
topology: tpu7x:2x2x1
jax: 0.10.0
libtpu: 0.0.40
codegen_flags: <defaults>
</compile_context>

<pallas_src>
import functools

import jax
import jax.numpy as jnp
from jax import lax
from jax.experimental import pallas as pl
from jax.experimental.pallas import tpu as pltpu

EPS = 1e-5
LANE = 128
VMEM_LIMIT = 32 * 1024 * 1024  # fits v5e/v6e/v7x scoped VMEM budgets


def _ru(x, m):
    return ((x + m - 1) // m) * m


def _pad2(a, rows, cols):
    return jnp.pad(a, ((0, rows - a.shape[0]), (0, cols - a.shape[1])))


# ----------------------------- kernels --------------------------------------


def _accum_stats(h, sum_ref, sumsq_ref, tile_n, n_rows):
    """Accumulate full-batch sum / sum-of-squares, masking padded rows."""
    i = pl.program_id(0)
    valid = jnp.minimum(n_rows - i * tile_n, tile_n)
    rows = lax.broadcasted_iota(jnp.int32, (tile_n, 1), 0)
    hm = jnp.where(rows < valid, h, 0.0)

    @pl.when(i == 0)
    def _():
        sum_ref[...] = jnp.zeros_like(sum_ref)
        sumsq_ref[...] = jnp.zeros_like(sumsq_ref)

    sum_ref[...] += jnp.sum(hm, axis=0, keepdims=True)
    sumsq_ref[...] += jnp.sum(hm * hm, axis=0, keepdims=True)


def _lin_stats_kernel(x_ref, w_ref, b_ref, h_ref, sum_ref, sumsq_ref,
                      *, tile_n, n_rows):
    # h = x @ W + b ; also accumulate batch statistics of h for the next BN.
    h = jnp.dot(x_ref[...], w_ref[...], preferred_element_type=jnp.float32)
    h = h + b_ref[...]
    h_ref[...] = h
    _accum_stats(h, sum_ref, sumsq_ref, tile_n, n_rows)


def _bn_lin_stats_kernel(h_ref, scale_ref, shift_ref, w_ref, b_ref,
                         hout_ref, sum_ref, sumsq_ref, *, tile_n, n_rows):
    # Fused BN (precomputed scale/shift) + ReLU + Linear, plus stats of output.
    a = jnp.maximum(h_ref[...] * scale_ref[...] + shift_ref[...], 0.0)
    h = jnp.dot(a, w_ref[...], preferred_element_type=jnp.float32) + b_ref[...]
    hout_ref[...] = h
    _accum_stats(h, sum_ref, sumsq_ref, tile_n, n_rows)


def _bn_tail_kernel(h_ref, scale_ref, shift_ref, x_ref,
                    w4_ref, b4_ref, w5a_ref, w5b_ref, b5_ref, w6_ref, b6_ref,
                    out_ref):
    # BN3 + ReLU -> emb -> nn2 (split-weight equivalent of concat) -> output.
    a = jnp.maximum(h_ref[...] * scale_ref[...] + shift_ref[...], 0.0)
    emb = jnp.dot(a, w4_ref[...], preferred_element_type=jnp.float32) + b4_ref[...]
    h5 = (jnp.dot(x_ref[...], w5a_ref[...], preferred_element_type=jnp.float32)
          + jnp.dot(emb, w5b_ref[...], preferred_element_type=jnp.float32)
          + b5_ref[...])
    h5 = jnp.maximum(h5, 0.0)
    out = jnp.dot(h5, w6_ref[...], preferred_element_type=jnp.float32) + b6_ref[...]
    out_ref[...] = out.astype(out_ref.dtype)


# --------------------------- pallas_call wrappers ----------------------------


def _tiled(tile_n, cols):
    return pl.BlockSpec((tile_n, cols), lambda i: (i, 0))


def _resident(shape):
    return pl.BlockSpec(shape, lambda i: (0, 0))


def _call_lin_stats(xp, w, b, tile_n, n_rows):
    npad, fp = xp.shape
    hp = w.shape[1]
    kernel = functools.partial(_lin_stats_kernel, tile_n=tile_n, n_rows=n_rows)
    return pl.pallas_call(
        kernel,
        grid=(npad // tile_n,),
        in_specs=[_tiled(tile_n, fp), _resident((fp, hp)), _resident((1, hp))],
        out_specs=(_tiled(tile_n, hp), _resident((1, hp)), _resident((1, hp))),
        out_shape=(jax.ShapeDtypeStruct((npad, hp), jnp.float32),
                   jax.ShapeDtypeStruct((1, hp), jnp.float32),
                   jax.ShapeDtypeStruct((1, hp), jnp.float32)),
        compiler_params=pltpu.CompilerParams(
            dimension_semantics=("arbitrary",),  # stats accumulator -> reduction
            vmem_limit_bytes=VMEM_LIMIT),
    )(xp, w, b)


def _call_bn_lin_stats(h, scale, shift, w, b, tile_n, n_rows):
    npad, hp_in = h.shape
    hp_out = w.shape[1]
    kernel = functools.partial(_bn_lin_stats_kernel, tile_n=tile_n, n_rows=n_rows)
    return pl.pallas_call(
        kernel,
        grid=(npad // tile_n,),
        in_specs=[_tiled(tile_n, hp_in), _resident((1, hp_in)), _resident((1, hp_in)),
                  _resident((hp_in, hp_out)), _resident((1, hp_out))],
        out_specs=(_tiled(tile_n, hp_out), _resident((1, hp_out)), _resident((1, hp_out))),
        out_shape=(jax.ShapeDtypeStruct((npad, hp_out), jnp.float32),
                   jax.ShapeDtypeStruct((1, hp_out), jnp.float32),
                   jax.ShapeDtypeStruct((1, hp_out), jnp.float32)),
        compiler_params=pltpu.CompilerParams(
            dimension_semantics=("arbitrary",),
            vmem_limit_bytes=VMEM_LIMIT),
    )(h, scale, shift, w, b)


def _call_bn_tail(h3, scale, shift, xp, w4, b4, w5a, w5b, b5, w6, b6, tile_n):
    npad, hp = h3.shape
    fp = xp.shape[1]
    ep = w4.shape[1]
    op = w6.shape[1]
    return pl.pallas_call(
        _bn_tail_kernel,
        grid=(npad // tile_n,),
        in_specs=[_tiled(tile_n, hp), _resident((1, hp)), _resident((1, hp)),
                  _tiled(tile_n, fp),
                  _resident((hp, ep)), _resident((1, ep)),
                  _resident((fp, hp)), _resident((ep, hp)), _resident((1, hp)),
                  _resident((hp, op)), _resident((1, op))],
        out_specs=_tiled(tile_n, op),
        out_shape=jax.ShapeDtypeStruct((npad, op), jnp.float32),
        compiler_params=pltpu.CompilerParams(
            dimension_semantics=("parallel",),  # no reduction -> megacore OK
            vmem_limit_bytes=VMEM_LIMIT),
    )(h3, scale, shift, xp, w4, b4, w5a, w5b, b5, w6, b6)


def _bn_scale_shift(s, ss, gamma, beta, n):
    # Tiny (1, H) math: fold BN into a single scale/shift per layer.
    mean = s / n
    var = jnp.maximum(ss / n - mean * mean, 0.0)
    scale = gamma * lax.rsqrt(var + EPS)
    shift = beta - mean * scale
    return scale, shift


# ------------------------------ forward pass ---------------------------------


@functools.partial(jax.jit, static_argnames=("tile_n",))
def fcn_forward(x, p, *, tile_n=512):
    n, input_dim = x.shape
    output_dim = p["w6"].shape[1]

    fp = _ru(input_dim, LANE)
    hp = _ru(p["w1"].shape[1], LANE)
    ep = _ru(p["w4"].shape[1], LANE)
    op = _ru(output_dim, LANE)

    # Batch tile: multiple of 8 sublanes; clamp to the (rounded-up) batch.
    tile_n = _ru(max(8, min(tile_n, _ru(n, 8))), 8)
    npad = _ru(n, tile_n)

    xp = _pad2(x.astype(jnp.float32), npad, fp)

    # Lane-dense (zero-padded) weights / biases / BN params.
    w1 = _pad2(p["w1"], fp, hp); b1 = _pad2(p["b1"], 1, hp)
    w2 = _pad2(p["w2"], hp, hp); b2 = _pad2(p["b2"], 1, hp)
    w3 = _pad2(p["w3"], hp, hp); b3 = _pad2(p["b3"], 1, hp)
    w4 = _pad2(p["w4"], hp, ep); b4 = _pad2(p["b4"], 1, ep)
    w5a = _pad2(p["w5a"], fp, hp)
    w5b = _pad2(p["w5b"], ep, hp)
    b5 = _pad2(p["b5"], 1, hp)
    w6 = _pad2(p["w6"], hp, op); b6 = _pad2(p["b6"], 1, op)
    g1 = _pad2(p["g1"], 1, hp); be1 = _pad2(p["be1"], 1, hp)
    g2 = _pad2(p["g2"], 1, hp); be2 = _pad2(p["be2"], 1, hp)
    g3 = _pad2(p["g3"], 1, hp); be3 = _pad2(p["be3"], 1, hp)

    # Layer 1 (Linear + stats), then BN1 folded into scale/shift.
    h1, s1, ss1 = _call_lin_stats(xp, w1, b1, tile_n, n)
    sc1, sh1 = _bn_scale_shift(s1, ss1, g1, be1, n)

    # Layer 2: BN1+ReLU+Linear (+ stats of its output).
    h2, s2, ss2 = _call_bn_lin_stats(h1, sc1, sh1, w2, b2, tile_n, n)
    sc2, sh2 = _bn_scale_shift(s2, ss2, g2, be2, n)

    # Layer 3.
    h3, s3, ss3 = _call_bn_lin_stats(h2, sc2, sh2, w3, b3, tile_n, n)
    sc3, sh3 = _bn_scale_shift(s3, ss3, g3, be3, n)

    # BN3+ReLU -> embedding -> nn2 (skip connection via split weights).
    out_p = _call_bn_tail(h3, sc3, sh3, xp, w4, b4, w5a, w5b, b5, w6, b6, tile_n)
    return out_p[:n, :output_dim]


# ------------------------------ params / reference ---------------------------


def init_params(key, input_dim, hidden_dim, embedding_dim, output_dim):
    """Deterministic PyTorch-style (uniform +-1/sqrt(fan_in)) init."""
    def linear(k, fan_in, fan_out):
        kw, kb = jax.random.split(k)
        bound = 1.0 / jnp.sqrt(fan_in)
        w = jax.random.uniform(kw, (fan_in, fan_out), jnp.float32, -bound, bound)
        b = jax.random.uniform(kb, (1, fan_out), jnp.float32, -bound, bound)
        return w, b

    keys = jax.random.split(key, 6)
    p = {}
    p["w1"], p["b1"] = linear(keys[0], input_dim, hidden_dim)
    p["w2"], p["b2"] = linear(keys[1], hidden_dim, hidden_dim)
    p["w3"], p["b3"] = linear(keys[2], hidden_dim, hidden_dim)
    p["w4"], p["b4"] = linear(keys[3], hidden_dim, embedding_dim)
    w5, p["b5"] = linear(keys[4], input_dim + embedding_dim, hidden_dim)
    p["w5a"], p["w5b"] = w5[:input_dim], w5[input_dim:]
    p["w6"], p["b6"] = linear(keys[5], hidden_dim, output_dim)
    for i in (1, 2, 3):
        p[f"g{i}"] = jnp.ones((1, hidden_dim), jnp.float32)
        p[f"be{i}"] = jnp.zeros((1, hidden_dim), jnp.float32)
    return p


def fcn_reference(x, p):
    """Pure-JAX reference (exact training-mode BN, full-precision matmuls)."""
    hi = jax.lax.Precision.HIGHEST

    def dot(a, b):
        return jnp.dot(a, b, precision=hi)

    def bn_relu(h, g, b):
        m = jnp.mean(h, axis=0, keepdims=True)
        v = jnp.mean((h - m) ** 2, axis=0, keepdims=True)
        return jnp.maximum((h - m) / jnp.sqrt(v + EPS) * g + b, 0.0)

    h = bn_relu(dot(x, p["w1"]) + p["b1"], p["g1"], p["be1"])
    h = bn_relu(dot(h, p["w2"]) + p["b2"], p["g2"], p["be2"])
    h = bn_relu(dot(h, p["w3"]) + p["b3"], p["g3"], p["be3"])
    emb = dot(h, p["w4"]) + p["b4"]
    cat = jnp.concatenate([x, emb], axis=1)
    w5 = jnp.concatenate([p["w5a"], p["w5b"]], axis=0)
    h2 = jnp.maximum(dot(cat, w5) + p["b5"], 0.0)
    return dot(h2, p["w6"]) + p["b6"]


if __name__ == "__main__":
    # Small shapes consistent with the module: X is [batch, input_dim].
    # batch=40 with tile_n=16 -> 3 grid steps with a partially masked last tile.
    batch, input_dim, hidden_dim, embedding_dim, output_dim = 40, 3, 32, 16, 2

    key = jax.random.PRNGKey(0)
    kx, kp = jax.random.split(key)
    x = jax.random.normal(kx, (batch, input_dim), jnp.float32)
    params = init_params(kp, input_dim, hidden_dim, embedding_dim, output_dim)

    out = jax.block_until_ready(fcn_forward(x, params, tile_n=16))
    ref = fcn_reference(x, params)

    assert out.shape == (batch, output_dim)
    err = jnp.max(jnp.abs(out - ref))
    assert jnp.allclose(out, ref, atol=2e-4, rtol=2e-4), f"mismatch vs reference: {err}"
    print("KERNEL_OK")
</pallas_src>

<mosaic_0001>
module attributes {stable_mosaic.version = 11 : i64} {
  func.func @_lin_stats_kernel(%arg0: i32, %arg1: memref<16x128xf32, #tpu.memory_space<vmem>>, %arg2: memref<128x128xf32, #tpu.memory_space<vmem>>, %arg3: memref<1x128xf32, #tpu.memory_space<vmem>>, %arg4: memref<16x128xf32, #tpu.memory_space<vmem>>, %arg5: memref<1x128xf32, #tpu.memory_space<vmem>>, %arg6: memref<1x128xf32, #tpu.memory_space<vmem>>) attributes {dimension_semantics = [#tpu.dimension_semantics<arbitrary>], iteration_bounds = array<i64: 3>, scalar_prefetch = 0 : i64, scratch_operands = 0 : i64, tpu.core_type = #tpu.core_type<tc>, window_params = [{transform_indices = @transform_0, window_bounds = array<i64: 16, 128>}, {pipeline_mode = #tpu.pipeline_mode<synchronous>, transform_indices = @transform_1, window_bounds = array<i64: 128, 128>}, {pipeline_mode = #tpu.pipeline_mode<synchronous>, transform_indices = @transform_2, window_bounds = array<i64: 1, 128>}, {transform_indices = @transform_3, window_bounds = array<i64: 16, 128>}, {pipeline_mode = #tpu.pipeline_mode<synchronous>, transform_indices = @transform_4, window_bounds = array<i64: 1, 128>}, {pipeline_mode = #tpu.pipeline_mode<synchronous>, transform_indices = @transform_5, window_bounds = array<i64: 1, 128>}]} {
    %c0 = arith.constant 0 : index
    %c0_0 = arith.constant 0 : index
    %0 = vector.load %arg1[%c0, %c0_0] : memref<16x128xf32, #tpu.memory_space<vmem>>, vector<16x128xf32>
    %c0_1 = arith.constant 0 : index
    %c0_2 = arith.constant 0 : index
    %1 = vector.load %arg2[%c0_1, %c0_2] : memref<128x128xf32, #tpu.memory_space<vmem>>, vector<128x128xf32>
    %cst = arith.constant dense<0.000000e+00> : vector<16x128xf32>
    %2 = tpu.matmul %0, %1, %cst {dimension_numbers = #tpu.dot_dimension_numbers<[1], [0], [0], [1], [0, 0, 1, 1], [], []>} : vector<16x128xf32>, vector<128x128xf32>, vector<16x128xf32> -> vector<16x128xf32>
    %c0_3 = arith.constant 0 : index
    %c0_4 = arith.constant 0 : index
    %3 = vector.load %arg3[%c0_3, %c0_4] : memref<1x128xf32, #tpu.memory_space<vmem>>, vector<1x128xf32>
    %4 = vector.broadcast %3 : vector<1x128xf32> to vector<16x128xf32>
    %5 = arith.addf %2, %4 : vector<16x128xf32>
    %c0_5 = arith.constant 0 : index
    %c0_6 = arith.constant 0 : index
    %6 = vector.load %arg4[%c0_5, %c0_6] : memref<16x128xf32, #tpu.memory_space<vmem>>, vector<16x128xf32>
    tpu.vector_store %arg4[%c0_5, %c0_6], %5 {strides = array<i32>} : memref<16x128xf32, #tpu.memory_space<vmem>>, vector<16x128xf32>,
    %c16_i32 = arith.constant 16 : i32
    %7 = arith.muli %arg0, %c16_i32 : i32
    %c40_i32 = arith.constant 40 : i32
    %8 = arith.subi %c40_i32, %7 : i32
    %c16_i32_7 = arith.constant 16 : i32
    %9 = arith.minsi %8, %c16_i32_7 : i32
    %10 = tpu.iota {dimensions = array<i32: 0>} : vector<16x1xi32>
    %11 = vector.broadcast %9 : i32 to vector<16x1xi32>
    %12 = arith.cmpi slt, %10, %11 : vector<16x1xi32>
    %cst_8 = arith.constant 0.000000e+00 : f32
    %13 = vector.shape_cast %12 : vector<16x1xi1> to vector<16x1xi1>
    %14 = vector.broadcast %13 : vector<16x1xi1> to vector<16x128xi1>
    %15 = vector.broadcast %cst_8 : f32 to vector<16x128xf32>
    %16 = arith.select %14, %5, %15 : vector<16x128xi1>, vector<16x128xf32>
    %c0_i32 = arith.constant 0 : i32
    %17 = arith.cmpi eq, %arg0, %c0_i32 : i32
    %18 = arith.extui %17 : i1 to i32
    %c0_i32_9 = arith.constant 0 : i32
    %19 = arith.cmpi ne, %18, %c0_i32_9 : i32
    scf.if %19 {
      %cst_20 = arith.constant 0.000000e+00 : f32
      %31 = vector.broadcast %cst_20 : f32 to vector<1x128xf32>
      %c0_21 = arith.constant 0 : index
      %c0_22 = arith.constant 0 : index
      %32 = vector.load %arg5[%c0_21, %c0_22] : memref<1x128xf32, #tpu.memory_space<vmem>>, vector<1x128xf32>
      tpu.vector_store %arg5[%c0_21, %c0_22], %31 {strides = array<i32>} : memref<1x128xf32, #tpu.memory_space<vmem>>, vector<1x128xf32>,
      %cst_23 = arith.constant 0.000000e+00 : f32
      %33 = vector.broadcast %cst_23 : f32 to vector<1x128xf32>
      %c0_24 = arith.constant 0 : index
      %c0_25 = arith.constant 0 : index
      %34 = vector.load %arg6[%c0_24, %c0_25] : memref<1x128xf32, #tpu.memory_space<vmem>>, vector<1x128xf32>
      tpu.vector_store %arg6[%c0_24, %c0_25], %33 {strides = array<i32>} : memref<1x128xf32, #tpu.memory_space<vmem>>, vector<1x128xf32>,
    } else {
    }
    %c0_10 = arith.constant 0 : index
    %c0_11 = arith.constant 0 : index
    %20 = vector.load %arg5[%c0_10, %c0_11] : memref<1x128xf32, #tpu.memory_space<vmem>>, vector<1x128xf32>
    %cst_12 = arith.constant dense<0.000000e+00> : vector<128xf32>
    %21 = vector.multi_reduction <add>, %16, %cst_12 [0] : vector<16x128xf32> to vector<128xf32>
    %22 = vector.shape_cast %21 : vector<128xf32> to vector<1x128xf32>
    %23 = arith.addf %20, %22 : vector<1x128xf32>
    %c0_13 = arith.constant 0 : index
    %c0_14 = arith.constant 0 : index
    %24 = vector.load %arg5[%c0_13, %c0_14] : memref<1x128xf32, #tpu.memory_space<vmem>>, vector<1x128xf32>
    tpu.vector_store %arg5[%c0_13, %c0_14], %23 {strides = array<i32>} : memref<1x128xf32, #tpu.memory_space<vmem>>, vector<1x128xf32>,
    %c0_15 = arith.constant 0 : index
    %c0_16 = arith.constant 0 : index
    %25 = vector.load %arg6[%c0_15, %c0_16] : memref<1x128xf32, #tpu.memory_space<vmem>>, vector<1x128xf32>
    %26 = arith.mulf %16, %16 : vector<16x128xf32>
    %cst_17 = arith.constant dense<0.000000e+00> : vector<128xf32>
    %27 = vector.multi_reduction <add>, %26, %cst_17 [0] : vector<16x128xf32> to vector<128xf32>
    %28 = vector.shape_cast %27 : vector<128xf32> to vector<1x128xf32>
    %29 = arith.addf %25, %28 : vector<1x128xf32>
    %c0_18 = arith.constant 0 : index
    %c0_19 = arith.constant 0 : index
    %30 = vector.load %arg6[%c0_18, %c0_19] : memref<1x128xf32, #tpu.memory_space<vmem>>, vector<1x128xf32>
    tpu.vector_store %arg6[%c0_18, %c0_19], %29 {strides = array<i32>} : memref<1x128xf32, #tpu.memory_space<vmem>>, vector<1x128xf32>,
    return
  }
  func.func @transform_0(%arg0: i32) -> (i32, i32) {
    %c0_i32 = arith.constant 0 : i32
    %c0_i32_0 = arith.constant 0 : i32
    return %arg0, %c0_i32 : i32, i32
  }
  func.func @transform_1(%arg0: i32) -> (i32, i32) {
    %c0_i32 = arith.constant 0 : i32
    %c0_i32_0 = arith.constant 0 : i32
    %c0_i32_1 = arith.constant 0 : i32
    return %c0_i32, %c0_i32_0 : i32, i32
  }
  func.func @transform_2(%arg0: i32) -> (i32, i32) {
    %c0_i32 = arith.constant 0 : i32
    %c0_i32_0 = arith.constant 0 : i32
    %c0_i32_1 = arith.constant 0 : i32
    return %c0_i32, %c0_i32_0 : i32, i32
  }
  func.func @transform_3(%arg0: i32) -> (i32, i32) {
    %c0_i32 = arith.constant 0 : i32
    %c0_i32_0 = arith.constant 0 : i32
    return %arg0, %c0_i32 : i32, i32
  }
  func.func @transform_4(%arg0: i32) -> (i32, i32) {
    %c0_i32 = arith.constant 0 : i32
    %c0_i32_0 = arith.constant 0 : i32
    %c0_i32_1 = arith.constant 0 : i32
    return %c0_i32, %c0_i32_0 : i32, i32
  }
  func.func @transform_5(%arg0: i32) -> (i32, i32) {
    %c0_i32 = arith.constant 0 : i32
    %c0_i32_0 = arith.constant 0 : i32
    %c0_i32_1 = arith.constant 0 : i32
    return %c0_i32, %c0_i32_0 : i32, i32
  }
}

module attributes {stable_mosaic.version = 11 : i64} {
  func.func @_bn_lin_stats_kernel(%arg0: i32, %arg1: memref<16x128xf32, #tpu.memory_space<vmem>>, %arg2: memref<1x128xf32, #tpu.memory_space<vmem>>, %arg3: memref<1x128xf32, #tpu.memory_space<vmem>>, %arg4: memref<128x128xf32, #tpu.memory_space<vmem>>, %arg5: memref<1x128xf32, #tpu.memory_space<vmem>>, %arg6: memref<16x128xf32, #tpu.memory_space<vmem>>, %arg7: memref<1x128xf32, #tpu.memory_space<vmem>>, %arg8: memref<1x128xf32, #tpu.memory_space<vmem>>) attributes {dimension_semantics = [#tpu.dimension_semantics<arbitrary>], iteration_bounds = array<i64: 3>, scalar_prefetch = 0 : i64, scratch_operands = 0 : i64, tpu.core_type = #tpu.core_type<tc>, window_params = [{transform_indices = @transform_0, window_bounds = array<i64: 16, 128>}, {pipeline_mode = #tpu.pipeline_mode<synchronous>, transform_indices = @transform_1, window_bounds = array<i64: 1, 128>}, {pipeline_mode = #tpu.pipeline_mode<synchronous>, transform_indices = @transform_2, window_bounds = array<i64: 1, 128>}, {pipeline_mode = #tpu.pipeline_mode<synchronous>, transform_indices = @transform_3, window_bounds = array<i64: 128, 128>}, {pipeline_mode = #tpu.pipeline_mode<synchronous>, transform_indices = @transform_4, window_bounds = array<i64: 1, 128>}, {transform_indices = @transform_5, window_bounds = array<i64: 16, 128>}, {pipeline_mode = #tpu.pipeline_mode<synchronous>, transform_indices = @transform_6, window_bounds = array<i64: 1, 128>}, {pipeline_mode = #tpu.pipeline_mode<synchronous>, transform_indices = @transform_7, window_bounds = array<i64: 1, 128>}]} {
    %c0 = arith.constant 0 : index
    %c0_0 = arith.constant 0 : index
    %0 = vector.load %arg1[%c0, %c0_0] : memref<16x128xf32, #tpu.memory_space<vmem>>, vector<16x128xf32>
    %c0_1 = arith.constant 0 : index
    %c0_2 = arith.constant 0 : index
    %1 = vector.load %arg2[%c0_1, %c0_2] : memref<1x128xf32, #tpu.memory_space<vmem>>, vector<1x128xf32>
    %2 = vector.broadcast %1 : vector<1x128xf32> to vector<16x128xf32>
    %3 = arith.mulf %0, %2 : vector<16x128xf32>
    %c0_3 = arith.constant 0 : index
    %c0_4 = arith.constant 0 : index
    %4 = vector.load %arg3[%c0_3, %c0_4] : memref<1x128xf32, #tpu.memory_space<vmem>>, vector<1x128xf32>
    %5 = vector.broadcast %4 : vector<1x128xf32> to vector<16x128xf32>
    %6 = arith.addf %3, %5 : vector<16x128xf32>
    %cst = arith.constant 0.000000e+00 : f32
    %7 = vector.broadcast %cst : f32 to vector<16x128xf32>
    %8 = arith.maximumf %6, %7 : vector<16x128xf32>
    %c0_5 = arith.constant 0 : index
    %c0_6 = arith.constant 0 : index
    %9 = vector.load %arg4[%c0_5, %c0_6] : memref<128x128xf32, #tpu.memory_space<vmem>>, vector<128x128xf32>
    %cst_7 = arith.constant dense<0.000000e+00> : vector<16x128xf32>
    %10 = tpu.matmul %8, %9, %cst_7 {dimension_numbers = #tpu.dot_dimension_numbers<[1], [0], [0], [1], [0, 0, 1, 1], [], []>} : vector<16x128xf32>, vector<128x128xf32>, vector<16x128xf32> -> vector<16x128xf32>
    %c0_8 = arith.constant 0 : index
    %c0_9 = arith.constant 0 : index
    %11 = vector.load %arg5[%c0_8, %c0_9] : memref<1x128xf32, #tpu.memory_space<vmem>>, vector<1x128xf32>
    %12 = vector.broadcast %11 : vector<1x128xf32> to vector<16x128xf32>
    %13 = arith.addf %10, %12 : vector<16x128xf32>
    %c0_10 = arith.constant 0 : index
    %c0_11 = arith.constant 0 : index
    %14 = vector.load %arg6[%c0_10, %c0_11] : memref<16x128xf32, #tpu.memory_space<vmem>>, vector<16x128xf32>
    tpu.vector_store %arg6[%c0_10, %c0_11], %13 {strides = array<i32>} : memref<16x128xf32, #tpu.memory_space<vmem>>, vector<16x128xf32>,
    %c16_i32 = arith.constant 16 : i32
    %15 = arith.muli %arg0, %c16_i32 : i32
    %c40_i32 = arith.constant 40 : i32
    %16 = arith.subi %c40_i32, %15 : i32
    %c16_i32_12 = arith.constant 16 : i32
    %17 = arith.minsi %16, %c16_i32_12 : i32
    %18 = tpu.iota {dimensions = array<i32: 0>} : vector<16x1xi32>
    %19 = vector.broadcast %17 : i32 to vector<16x1xi32>
    %20 = arith.cmpi slt, %18, %19 : vector<16x1xi32>
    %cst_13 = arith.constant 0.000000e+00 : f32
    %21 = vector.shape_cast %20 : vector<16x1xi1> to vector<16x1xi1>
    %22 = vector.broadcast %21 : vector<16x1xi1> to vector<16x128xi1>
    %23 = vector.broadcast %cst_13 : f32 to vector<16x128xf32>
    %24 = arith.select %22, %13, %23 : vector<16x128xi1>, vector<16x128xf32>
    %c0_i32 = arith.constant 0 : i32
    %25 = arith.cmpi eq, %arg0, %c0_i32 : i32
    %26 = arith.extui %25 : i1 to i32
    %c0_i32_14 = arith.constant 0 : i32
    %27 = arith.cmpi ne, %26, %c0_i32_14 : i32
    scf.if %27 {
      %cst_25 = arith.constant 0.000000e+00 : f32
      %39 = vector.broadcast %cst_25 : f32 to vector<1x128xf32>
      %c0_26 = arith.constant 0 : index
      %c0_27 = arith.constant 0 : index
      %40 = vector.load %arg7[%c0_26, %c0_27] : memref<1x128xf32, #tpu.memory_space<vmem>>, vector<1x128xf32>
      tpu.vector_store %arg7[%c0_26, %c0_27], %39 {strides = array<i32>} : memref<1x128xf32, #tpu.memory_space<vmem>>, vector<1x128xf32>,
      %cst_28 = arith.constant 0.000000e+00 : f32
      %41 = vector.broadcast %cst_28 : f32 to vector<1x128xf32>
      %c0_29 = arith.constant 0 : index
      %c0_30 = arith.constant 0 : index
      %42 = vector.load %arg8[%c0_29, %c0_30] : memref<1x128xf32, #tpu.memory_space<vmem>>, vector<1x128xf32>
      tpu.vector_store %arg8[%c0_29, %c0_30], %41 {strides = array<i32>} : memref<1x128xf32, #tpu.memory_space<vmem>>, vector<1x128xf32>,
    } else {
    }
    %c0_15 = arith.constant 0 : index
    %c0_16 = arith.constant 0 : index
    %28 = vector.load %arg7[%c0_15, %c0_16] : memref<1x128xf32, #tpu.memory_space<vmem>>, vector<1x128xf32>
    %cst_17 = arith.constant dense<0.000000e+00> : vector<128xf32>
    %29 = vector.multi_reduction <add>, %24, %cst_17 [0] : vector<16x128xf32> to vector<128xf32>
    %30 = vector.shape_cast %29 : vector<128xf32> to vector<1x128xf32>
    %31 = arith.addf %28, %30 : vector<1x128xf32>
    %c0_18 = arith.constant 0 : index
    %c0_19 = arith.constant 0 : index
    %32 = vector.load %arg7[%c0_18, %c0_19] : memref<1x128xf32, #tpu.memory_space<vmem>>, vector<1x128xf32>
    tpu.vector_store %arg7[%c0_18, %c0_19], %31 {strides = array<i32>} : memref<1x128xf32, #tpu.memory_space<vmem>>, vector<1x128xf32>,
    %c0_20 = arith.constant 0 : index
    %c0_21 = arith.constant 0 : index
    %33 = vector.load %arg8[%c0_20, %c0_21] : memref<1x128xf32, #tpu.memory_space<vmem>>, vector<1x128xf32>
    %34 = arith.mulf %24, %24 : vector<16x128xf32>
    %cst_22 = arith.constant dense<0.000000e+00> : vector<128xf32>
    %35 = vector.multi_reduction <add>, %34, %cst_22 [0] : vector<16x128xf32> to vector<128xf32>
    %36 = vector.shape_cast %35 : vector<128xf32> to vector<1x128xf32>
    %37 = arith.addf %33, %36 : vector<1x128xf32>
    %c0_23 = arith.constant 0 : index
    %c0_24 = arith.constant 0 : index
    %38 = vector.load %arg8[%c0_23, %c0_24] : memref<1x128xf32, #tpu.memory_space<vmem>>, vector<1x128xf32>
    tpu.vector_store %arg8[%c0_23, %c0_24], %37 {strides = array<i32>} : memref<1x128xf32, #tpu.memory_space<vmem>>, vector<1x128xf32>,
    return
  }
  func.func @transform_0(%arg0: i32) -> (i32, i32) {
    %c0_i32 = arith.constant 0 : i32
    %c0_i32_0 = arith.constant 0 : i32
    return %arg0, %c0_i32 : i32, i32
  }
  func.func @transform_1(%arg0: i32) -> (i32, i32) {
    %c0_i32 = arith.constant 0 : i32
    %c0_i32_0 = arith.constant 0 : i32
    %c0_i32_1 = arith.constant 0 : i32
    return %c0_i32, %c0_i32_0 : i32, i32
  }
  func.func @transform_2(%arg0: i32) -> (i32, i32) {
    %c0_i32 = arith.constant 0 : i32
    %c0_i32_0 = arith.constant 0 : i32
    %c0_i32_1 = arith.constant 0 : i32
    return %c0_i32, %c0_i32_0 : i32, i32
  }
  func.func @transform_3(%arg0: i32) -> (i32, i32) {
    %c0_i32 = arith.constant 0 : i32
    %c0_i32_0 = arith.constant 0 : i32
    %c0_i32_1 = arith.constant 0 : i32
    return %c0_i32, %c0_i32_0 : i32, i32
  }
  func.func @transform_4(%arg0: i32) -> (i32, i32) {
    %c0_i32 = arith.constant 0 : i32
    %c0_i32_0 = arith.constant 0 : i32
    %c0_i32_1 = arith.constant 0 : i32
    return %c0_i32, %c0_i32_0 : i32, i32
  }
  func.func @transform_5(%arg0: i32) -> (i32, i32) {
    %c0_i32 = arith.constant 0 : i32
    %c0_i32_0 = arith.constant 0 : i32
    return %arg0, %c0_i32 : i32, i32
  }
  func.func @transform_6(%arg0: i32) -> (i32, i32) {
    %c0_i32 = arith.constant 0 : i32
    %c0_i32_0 = arith.constant 0 : i32
    %c0_i32_1 = arith.constant 0 : i32
    return %c0_i32, %c0_i32_0 : i32, i32
  }
  func.func @transform_7(%arg0: i32) -> (i32, i32) {
    %c0_i32 = arith.constant 0 : i32
    %c0_i32_0 = arith.constant 0 : i32
    %c0_i32_1 = arith.constant 0 : i32
    return %c0_i32, %c0_i32_0 : i32, i32
  }
}

module attributes {stable_mosaic.version = 11 : i64} {
  func.func @_bn_tail_kernel(%arg0: i32, %arg1: memref<16x128xf32, #tpu.memory_space<vmem>>, %arg2: memref<1x128xf32, #tpu.memory_space<vmem>>, %arg3: memref<1x128xf32, #tpu.memory_space<vmem>>, %arg4: memref<16x128xf32, #tpu.memory_space<vmem>>, %arg5: memref<128x128xf32, #tpu.memory_space<vmem>>, %arg6: memref<1x128xf32, #tpu.memory_space<vmem>>, %arg7: memref<128x128xf32, #tpu.memory_space<vmem>>, %arg8: memref<128x128xf32, #tpu.memory_space<vmem>>, %arg9: memref<1x128xf32, #tpu.memory_space<vmem>>, %arg10: memref<128x128xf32, #tpu.memory_space<vmem>>, %arg11: memref<1x128xf32, #tpu.memory_space<vmem>>, %arg12: memref<16x128xf32, #tpu.memory_space<vmem>>) attributes {dimension_semantics = [#tpu.dimension_semantics<parallel>], iteration_bounds = array<i64: 3>, scalar_prefetch = 0 : i64, scratch_operands = 0 : i64, tpu.core_type = #tpu.core_type<tc>, window_params = [{transform_indices = @transform_0, window_bounds = array<i64: 16, 128>}, {pipeline_mode = #tpu.pipeline_mode<synchronous>, transform_indices = @transform_1, window_bounds = array<i64: 1, 128>}, {pipeline_mode = #tpu.pipeline_mode<synchronous>, transform_indices = @transform_2, window_bounds = array<i64: 1, 128>}, {transform_indices = @transform_3, window_bounds = array<i64: 16, 128>}, {pipeline_mode = #tpu.pipeline_mode<synchronous>, transform_indices = @transform_4, window_bounds = array<i64: 128, 128>}, {pipeline_mode = #tpu.pipeline_mode<synchronous>, transform_indices = @transform_5, window_bounds = array<i64: 1, 128>}, {pipeline_mode = #tpu.pipeline_mode<synchronous>, transform_indices = @transform_6, window_bounds = array<i64: 128, 128>}, {pipeline_mode = #tpu.pipeline_mode<synchronous>, transform_indices = @transform_7, window_bounds = array<i64: 128, 128>}, {pipeline_mode = #tpu.pipeline_mode<synchronous>, transform_indices = @transform_8, window_bounds = array<i64: 1, 128>}, {pipeline_mode = #tpu.pipeline_mode<synchronous>, transform_indices = @transform_9, window_bounds = array<i64: 128, 128>}, {pipeline_mode = #tpu.pipeline_mode<synchronous>, transform_indices = @transform_10, window_bounds = array<i64: 1, 128>}, {transform_indices = @transform_11, window_bounds = array<i64: 16, 128>}]} {
    %c0 = arith.constant 0 : index
    %c0_0 = arith.constant 0 : index
    %0 = vector.load %arg1[%c0, %c0_0] : memref<16x128xf32, #tpu.memory_space<vmem>>, vector<16x128xf32>
    %c0_1 = arith.constant 0 : index
    %c0_2 = arith.constant 0 : index
    %1 = vector.load %arg2[%c0_1, %c0_2] : memref<1x128xf32, #tpu.memory_space<vmem>>, vector<1x128xf32>
    %2 = vector.broadcast %1 : vector<1x128xf32> to vector<16x128xf32>
    %3 = arith.mulf %0, %2 : vector<16x128xf32>
    %c0_3 = arith.constant 0 : index
    %c0_4 = arith.constant 0 : index
    %4 = vector.load %arg3[%c0_3, %c0_4] : memref<1x128xf32, #tpu.memory_space<vmem>>, vector<1x128xf32>
    %5 = vector.broadcast %4 : vector<1x128xf32> to vector<16x128xf32>
    %6 = arith.addf %3, %5 : vector<16x128xf32>
    %cst = arith.constant 0.000000e+00 : f32
    %7 = vector.broadcast %cst : f32 to vector<16x128xf32>
    %8 = arith.maximumf %6, %7 : vector<16x128xf32>
    %c0_5 = arith.constant 0 : index
    %c0_6 = arith.constant 0 : index
    %9 = vector.load %arg5[%c0_5, %c0_6] : memref<128x128xf32, #tpu.memory_space<vmem>>, vector<128x128xf32>
    %cst_7 = arith.constant dense<0.000000e+00> : vector<16x128xf32>
    %10 = tpu.matmul %8, %9, %cst_7 {dimension_numbers = #tpu.dot_dimension_numbers<[1], [0], [0], [1], [0, 0, 1, 1], [], []>} : vector<16x128xf32>, vector<128x128xf32>, vector<16x128xf32> -> vector<16x128xf32>
    %c0_8 = arith.constant 0 : index
    %c0_9 = arith.constant 0 : index
    %11 = vector.load %arg6[%c0_8, %c0_9] : memref<1x128xf32, #tpu.memory_space<vmem>>, vector<1x128xf32>
    %12 = vector.broadcast %11 : vector<1x128xf32> to vector<16x128xf32>
    %13 = arith.addf %10, %12 : vector<16x128xf32>
    %c0_10 = arith.constant 0 : index
    %c0_11 = arith.constant 0 : index
    %14 = vector.load %arg4[%c0_10, %c0_11] : memref<16x128xf32, #tpu.memory_space<vmem>>, vector<16x128xf32>
    %c0_12 = arith.constant 0 : index
    %c0_13 = arith.constant 0 : index
    %15 = vector.load %arg7[%c0_12, %c0_13] : memref<128x128xf32, #tpu.memory_space<vmem>>, vector<128x128xf32>
    %cst_14 = arith.constant dense<0.000000e+00> : vector<16x128xf32>
    %16 = tpu.matmul %14, %15, %cst_14 {dimension_numbers = #tpu.dot_dimension_numbers<[1], [0], [0], [1], [0, 0, 1, 1], [], []>} : vector<16x128xf32>, vector<128x128xf32>, vector<16x128xf32> -> vector<16x128xf32>
    %c0_15 = arith.constant 0 : index
    %c0_16 = arith.constant 0 : index
    %17 = vector.load %arg8[%c0_15, %c0_16] : memref<128x128xf32, #tpu.memory_space<vmem>>, vector<128x128xf32>
    %cst_17 = arith.constant dense<0.000000e+00> : vector<16x128xf32>
    %18 = tpu.matmul %13, %17, %cst_17 {dimension_numbers = #tpu.dot_dimension_numbers<[1], [0], [0], [1], [0, 0, 1, 1], [], []>} : vector<16x128xf32>, vector<128x128xf32>, vector<16x128xf32> -> vector<16x128xf32>
    %19 = arith.addf %16, %18 : vector<16x128xf32>
    %c0_18 = arith.constant 0 : index
    %c0_19 = arith.constant 0 : index
    %20 = vector.load %arg9[%c0_18, %c0_19] : memref<1x128xf32, #tpu.memory_space<vmem>>, vector<1x128xf32>
    %21 = vector.broadcast %20 : vector<1x128xf32> to vector<16x128xf32>
    %22 = arith.addf %19, %21 : vector<16x128xf32>
    %cst_20 = arith.constant 0.000000e+00 : f32
    %23 = vector.broadcast %cst_20 : f32 to vector<16x128xf32>
    %24 = arith.maximumf %22, %23 : vector<16x128xf32>
    %c0_21 = arith.constant 0 : index
    %c0_22 = arith.constant 0 : index
    %25 = vector.load %arg10[%c0_21, %c0_22] : memref<128x128xf32, #tpu.memory_space<vmem>>, vector<128x128xf32>
    %cst_23 = arith.constant dense<0.000000e+00> : vector<16x128xf32>
    %26 = tpu.matmul %24, %25, %cst_23 {dimension_numbers = #tpu.dot_dimension_numbers<[1], [0], [0], [1], [0, 0, 1, 1], [], []>} : vector<16x128xf32>, vector<128x128xf32>, vector<16x128xf32> -> vector<16x128xf32>
    %c0_24 = arith.constant 0 : index
    %c0_25 = arith.constant 0 : index
    %27 = vector.load %arg11[%c0_24, %c0_25] : memref<1x128xf32, #tpu.memory_space<vmem>>, vector<1x128xf32>
    %28 = vector.broadcast %27 : vector<1x128xf32> to vector<16x128xf32>
    %29 = arith.addf %26, %28 : vector<16x128xf32>
    %c0_26 = arith.constant 0 : index
    %c0_27 = arith.constant 0 : index
    %30 = vector.load %arg12[%c0_26, %c0_27] : memref<16x128xf32, #tpu.memory_space<vmem>>, vector<16x128xf32>
    tpu.vector_store %arg12[%c0_26, %c0_27], %29 {strides = array<i32>} : memref<16x128xf32, #tpu.memory_space<vmem>>, vector<16x128xf32>,
    return
  }
  func.func @transform_0(%arg0: i32) -> (i32, i32) {
    %c0_i32 = arith.constant 0 : i32
    %c0_i32_0 = arith.constant 0 : i32
    return %arg0, %c0_i32 : i32, i32
  }
  func.func @transform_1(%arg0: i32) -> (i32, i32) {
    %c0_i32 = arith.constant 0 : i32
    %c0_i32_0 = arith.constant 0 : i32
    %c0_i32_1 = arith.constant 0 : i32
    return %c0_i32, %c0_i32_0 : i32, i32
  }
  func.func @transform_2(%arg0: i32) -> (i32, i32) {
    %c0_i32 = arith.constant 0 : i32
    %c0_i32_0 = arith.constant 0 : i32
    %c0_i32_1 = arith.constant 0 : i32
    return %c0_i32, %c0_i32_0 : i32, i32
  }
  func.func @transform_3(%arg0: i32) -> (i32, i32) {
    %c0_i32 = arith.constant 0 : i32
    %c0_i32_0 = arith.constant 0 : i32
    return %arg0, %c0_i32 : i32, i32
  }
  func.func @transform_4(%arg0: i32) -> (i32, i32) {
    %c0_i32 = arith.constant 0 : i32
    %c0_i32_0 = arith.constant 0 : i32
    %c0_i32_1 = arith.constant 0 : i32
    return %c0_i32, %c0_i32_0 : i32, i32
  }
  func.func @transform_5(%arg0: i32) -> (i32, i32) {
    %c0_i32 = arith.constant 0 : i32
    %c0_i32_0 = arith.constant 0 : i32
    %c0_i32_1 = arith.constant 0 : i32
    return %c0_i32, %c0_i32_0 : i32, i32
  }
  func.func @transform_6(%arg0: i32) -> (i32, i32) {
    %c0_i32 = arith.constant 0 : i32
    %c0_i32_0 = arith.constant 0 : i32
    %c0_i32_1 = arith.constant 0 : i32
    return %c0_i32, %c0_i32_0 : i32, i32
  }
  func.func @transform_7(%arg0: i32) -> (i32, i32) {
    %c0_i32 = arith.constant 0 : i32
    %c0_i32_0 = arith.constant 0 : i32
    %c0_i32_1 = arith.constant 0 : i32
    return %c0_i32, %c0_i32_0 : i32, i32
  }
  func.func @transform_8(%arg0: i32) -> (i32, i32) {
    %c0_i32 = arith.constant 0 : i32
    %c0_i32_0 = arith.constant 0 : i32
    %c0_i32_1 = arith.constant 0 : i32
    return %c0_i32, %c0_i32_0 : i32, i32
  }
  func.func @transform_9(%arg0: i32) -> (i32, i32) {
    %c0_i32 = arith.constant 0 : i32
    %c0_i32_0 = arith.constant 0 : i32
    %c0_i32_1 = arith.constant 0 : i32
    return %c0_i32, %c0_i32_0 : i32, i32
  }
  func.func @transform_10(%arg0: i32) -> (i32, i32) {
    %c0_i32 = arith.constant 0 : i32
    %c0_i32_0 = arith.constant 0 : i32
    %c0_i32_1 = arith.constant 0 : i32
    return %c0_i32, %c0_i32_0 : i32, i32
  }
  func.func @transform_11(%arg0: i32) -> (i32, i32) {
    %c0_i32 = arith.constant 0 : i32
    %c0_i32_0 = arith.constant 0 : i32
    return %arg0, %c0_i32 : i32, i32
  }
}

</mosaic_0001>

<llo_original>
// kernel: fcn_forward.4
$region0: #{fcn_forward.4}
  #allocation0 [shape = 'u32[]', space=smem, size = 0x4, offset = 0x4, fixed_abs, tag = 'smem constant byte address 0x4 - core index']
  #allocation1 [shape = 'u32[144,128]{1,0:T(1,128)}', space=vmem, size = 0x12000, scoped, tag = 'internal scratch']
  %s0 = inlined_call_operand.vmem [shape: f32[48,128], index: 0, kind: input, shape index: {}]
  %s1 = inlined_call_operand.vmem [shape: f32[128,128], index: 1, kind: input, shape index: {}]
  %s2 = inlined_call_operand.vmem [shape: f32[1,128], index: 2, kind: input, shape index: {}]
  %s3 = inlined_call_operand.vmem [shape: f32[48,128], index: 3, kind: output, shape index: {0}]
  %s4 = inlined_call_operand.vmem [shape: f32[1,128], index: 4, kind: output, shape index: {1}]
  %s5 = inlined_call_operand.vmem [shape: f32[1,128], index: 5, kind: output, shape index: {2}]
  %6 = xla_tuple %s3, %s4, %s5
  %s7 = sld [smem:[#allocation0]]
  $region65: #{fcn_forward.4} parent=0
    _
  %s9 = ssub.s32 1, %s7
  %s10 = scalar_select 0, %s9, %s7
  loop: start=0, step=1, limit=5
  $region2: #{fcn_forward.4} parent=0 // loop_pre_header
    _
  $region3: #{fcn_forward.4} parent=0 // loop_header
    %s12 = sphi 0, %s16
    %p13 = scmp.ge.s32.totalorder %s12, 5
    %s22 = sphi 0, %s24
    %s25 = sphi 0, %s22
    %s26 = sphi 0, %s25
    %s42 = sphi 0, %s26
    %s46 = sphi 0, %s46
    %s48 = sphi 0, %s46
    %s49 = sphi 0, %s48
    %s63 = sphi 0, %s49
    %s67 = sphi 0, %s67
    %s69 = sphi 0, %s67
    %s70 = sphi 0, %s69
    %s84 = sphi 0, %s70
    %s90 = sphi 0, %s92
    %s93 = sphi 0, %s90
    %s94 = sphi 0, %s93
    %s110 = sphi 0, %s94
    %s114 = sphi 0, %s114
    %s116 = sphi 0, %s114
    %s117 = sphi 0, %s116
    %s131 = sphi 0, %s117
    %s135 = sphi 0, %s135
    %s137 = sphi 0, %s135
    %s138 = sphi 0, %s137
    %s152 = sphi 0, %s138
  $region4: #{fcn_forward.4} parent=0 // loop_header_branch
    %15 = sbr.rel (%p13) target = $region8
  $region5: #{fcn_forward.4} parent=0 // loop_body
    %s17 = ssub.s32 %s12, 1
    %s18 = ssub.s32 %s12, 2
    %s19 = sadd.s32 %s12, 1
    %s20 = ssub.s32 %s12, %s19
    %p21 = scmp.eq.s32.totalorder %s20, 0
    %s23 = sadd.s32 %s22, 1
    %s24 = scalar_select %p21, %s22, %s23
    %p27 = pneg %p21
    %p28 = scmp.eq.s32.totalorder %s12, 2
    %p29 = por %p27, %p28
    %p30 = scmp.ne.s32.totalorder %s22, %s25
    %p31 = scmp.eq.s32.totalorder %s12, 0
    %p32 = por %p30, %p31
    %p33 = scmp.ne.s32.totalorder %s22, %s25
    %p34 = scmp.eq.s32.totalorder %s17, 2
    %p35 = por %p33, %p34
    %p36 = scmp.ne.s32.totalorder %s25, %s26
    %p37 = scmp.eq.s32.totalorder %s17, 0
    %p38 = por %p36, %p37
    %p39 = scmp.ne.s32.totalorder %s25, %s26
    %p40 = scmp.eq.s32.totalorder %s18, 2
    %p41 = por %p39, %p40
    %p43 = scmp.ne.s32.totalorder %s26, %s42
    %p44 = scmp.eq.s32.totalorder %s18, 0
    %p45 = por %p43, %p44
    %s47 = sadd.s32 %s46, 1
    %p50 = scmp.eq.s32.totalorder %s12, 2
    %p51 = scmp.ne.s32.totalorder %s46, %s48
    %p52 = scmp.eq.s32.totalorder %s12, 0
    %p53 = por %p51, %p52
    %p54 = scmp.ne.s32.totalorder %s46, %s48
    %p55 = scmp.eq.s32.totalorder %s17, 2
    %p56 = por %p54, %p55
    %p57 = scmp.ne.s32.totalorder %s48, %s49
    %p58 = scmp.eq.s32.totalorder %s17, 0
    %p59 = por %p57, %p58
    %p60 = scmp.ne.s32.totalorder %s48, %s49
    %p61 = scmp.eq.s32.totalorder %s18, 2
    %p62 = por %p60, %p61
    %p64 = scmp.ne.s32.totalorder %s49, %s63
    %p65 = scmp.eq.s32.totalorder %s18, 0
    %p66 = por %p64, %p65
    %s68 = sadd.s32 %s67, 1
    %p71 = scmp.eq.s32.totalorder %s12, 2
    %p72 = scmp.ne.s32.totalorder %s67, %s69
    %p73 = scmp.eq.s32.totalorder %s12, 0
    %p74 = por %p72, %p73
    %p75 = scmp.ne.s32.totalorder %s67, %s69
    %p76 = scmp.eq.s32.totalorder %s17, 2
    %p77 = por %p75, %p76
    %p78 = scmp.ne.s32.totalorder %s69, %s70
    %p79 = scmp.eq.s32.totalorder %s17, 0
    %p80 = por %p78, %p79
    %p81 = scmp.ne.s32.totalorder %s69, %s70
    %p82 = scmp.eq.s32.totalorder %s18, 2
    %p83 = por %p81, %p82
    %p85 = scmp.ne.s32.totalorder %s70, %s84
    %p86 = scmp.eq.s32.totalorder %s18, 0
    %p87 = por %p85, %p86
    %s88 = ssub.s32 %s12, %s19
    %p89 = scmp.eq.s32.totalorder %s88, 0
    %s91 = sadd.s32 %s90, 1
    %s92 = scalar_select %p89, %s90, %s91
    %p95 = pneg %p89
    %p96 = scmp.eq.s32.totalorder %s12, 2
    %p97 = por %p95, %p96
    %p98 = scmp.ne.s32.totalorder %s90, %s93
    %p99 = scmp.eq.s32.totalorder %s12, 0
    %p100 = por %p98, %p99
    %p101 = scmp.ne.s32.totalorder %s90, %s93
    %p102 = scmp.eq.s32.totalorder %s17, 2
    %p103 = por %p101, %p102
    %p104 = scmp.ne.s32.totalorder %s93, %s94
    %p105 = scmp.eq.s32.totalorder %s17, 0
    %p106 = por %p104, %p105
    %p107 = scmp.ne.s32.totalorder %s93, %s94
    %p108 = scmp.eq.s32.totalorder %s18, 2
    %p109 = por %p107, %p108
    %p111 = scmp.ne.s32.totalorder %s94, %s110
    %p112 = scmp.eq.s32.totalorder %s18, 0
    %p113 = por %p111, %p112
    %s115 = sadd.s32 %s114, 1
    %p118 = scmp.eq.s32.totalorder %s12, 2
    %p119 = scmp.ne.s32.totalorder %s114, %s116
    %p120 = scmp.eq.s32.totalorder %s12, 0
    %p121 = por %p119, %p120
    %p122 = scmp.ne.s32.totalorder %s114, %s116
    %p123 = scmp.eq.s32.totalorder %s17, 2
    %p124 = por %p122, %p123
    %p125 = scmp.ne.s32.totalorder %s116, %s117
    %p126 = scmp.eq.s32.totalorder %s17, 0
    %p127 = por %p125, %p126
    %p128 = scmp.ne.s32.totalorder %s116, %s117
    %p129 = scmp.eq.s32.totalorder %s18, 2
    %p130 = por %p128, %p129
    %p132 = scmp.ne.s32.totalorder %s117, %s131
    %p133 = scmp.eq.s32.totalorder %s18, 0
    %p134 = por %p132, %p133
    %s136 = sadd.s32 %s135, 1
    %p139 = scmp.eq.s32.totalorder %s12, 2
    %p140 = scmp.ne.s32.totalorder %s135, %s137
    %p141 = scmp.eq.s32.totalorder %s12, 0
    %p142 = por %p140, %p141
    %p143 = scmp.ne.s32.totalorder %s135, %s137
    %p144 = scmp.eq.s32.totalorder %s17, 2
    %p145 = por %p143, %p144
    %p146 = scmp.ne.s32.totalorder %s137, %s138
    %p147 = scmp.eq.s32.totalorder %s17, 0
    %p148 = por %p146, %p147
    %p149 = scmp.ne.s32.totalorder %s137, %s138
    %p150 = scmp.eq.s32.totalorder %s18, 2
    %p151 = por %p149, %p150
    %p153 = scmp.ne.s32.totalorder %s138, %s152
    %p154 = scmp.eq.s32.totalorder %s18, 0
    %p155 = por %p153, %p154
    %p156 = scmp.le.s32.totalorder 1, %s12
    %p157 = scmp.lt.s32.totalorder %s12, 4
    %p158 = pnand %p156, %p157
    %p159 = pneg %p158
    // Predicated region
    $region9: #{fcn_forward.4} parent=5 // pred_check
      _
    $region10: #{fcn_forward.4} parent=5 // pred_check_branch
      %161 = sbr.rel (%p158) target = $region12
    $region11: #{fcn_forward.4} parent=5 // pred_region
      %s162 = ssub.s32 %s12, 1
      // Predicated region
      $region13: #{fcn_forward.4} parent=11 // pred_check
        %p163 = pneg %p59
      $region14: #{fcn_forward.4} parent=11 // pred_check_branch
        %165 = sbr.rel (%p163) target = $region16
      $region15: #{fcn_forward.4} parent=11 // pred_region
        _
      $region16: #{fcn_forward.4} parent=11 // pred_fallthru
        _
      // Predicated region
      $region17: #{fcn_forward.4} parent=11 // pred_check
        %p166 = pneg %p80
      $region18: #{fcn_forward.4} parent=11 // pred_check_branch
        %168 = sbr.rel (%p166) target = $region20
      $region19: #{fcn_forward.4} parent=11 // pred_region
        _
      $region20: #{fcn_forward.4} parent=11 // pred_fallthru
        _
    $region12: #{fcn_forward.4} parent=5 // pred_fallthru
      _
    %p169 = scmp.lt.s32.totalorder %s12, 3
    // Predicated region
    $region21: #{fcn_forward.4} parent=5 // pred_check
      %p170 = pneg %p169
    $region22: #{fcn_forward.4} parent=5 // pred_check_branch
      %172 = sbr.rel (%p170) target = $region24
    $region23: #{fcn_forward.4} parent=5 // pred_region
      // Predicated region
      $region25: #{fcn_forward.4} parent=23 // pred_check
        %p173 = pneg %p32
      $region26: #{fcn_forward.4} parent=23 // pred_check_branch
        %175 = sbr.rel (%p173) target = $region28
      $region27: #{fcn_forward.4} parent=23 // pred_region
        %s176 = smul.u32 2, %s12
        %p177 = scmp.lt.s32.totalorder %s176, 5
        %s178 = scalar_select %p177, %s176, 5
        %s179 = smul.addr %s178, 8
        %s180 = scalar_lea.vmem %s0, %s179
        %s181 = smul.u32 2, %s12
      $region28: #{fcn_forward.4} parent=23 // pred_fallthru
        _
    $region24: #{fcn_forward.4} parent=5 // pred_fallthru
      _
    %p182 = scmp.le.s32.totalorder 1, %s12
    %p183 = scmp.lt.s32.totalorder %s12, 4
    %p184 = pnand %p182, %p183
    %p185 = pneg %p184
    // Predicated region
    $region29: #{fcn_forward.4} parent=5 // pred_check
      _
    $region30: #{fcn_forward.4} parent=5 // pred_check_branch
      %187 = sbr.rel (%p184) target = $region32
    $region31: #{fcn_forward.4} parent=5 // pred_region
      %s188 = ssub.s32 %s12, 1
      %s189 = smul.u32 2, %s17
      %p190 = scmp.lt.s32.totalorder %s189, 5
      %s191 = scalar_select %p190, %s189, 5
      %s192 = smul.addr %s191, 8
      %s193 = scalar_lea.vmem %s0, %s192
      %p194 = pneg %p38
      %p195 = pneg %p35
      %p196 = pneg %p59
      %p197 = pneg %p56
      %p198 = pneg %p80
      %p199 = pneg %p77
      %p200 = pneg %p106
      %p201 = pneg %p103
      %s202 = smul.u32 2, %s17
      %p203 = scmp.lt.s32.totalorder %s202, 5
      %s204 = scalar_select %p203, %s202, 5
      %s205 = smul.addr %s204, 8
      %s206 = scalar_lea.vmem %s3, %s205
      %p207 = pneg %p127
      %p208 = pneg %p124
      %p209 = pneg %p148
      %p210 = pneg %p145
      %s211 = smul.u32 2, %s17
      %p212 = scmp.lt.s32.totalorder %s211, 5
      %s213 = scalar_select %p212, %s211, 5
      %s214 = smul.addr %s213, 8
      %s215 = scalar_lea.vmem %s0, %s214
      %s216 = smul.u32 2, %s17
      %s217 = smul.u32 2, %s17
      %p218 = scmp.lt.s32.totalorder %s217, 5
      %s219 = scalar_select %p218, %s217, 5
      %s220 = smul.addr %s219, 8
      %s221 = scalar_lea.vmem %s3, %s220
      %s222 = smul.u32 2, %s17
      %v223 = vld [vmem:[%s215] sm:$0xff]
      %v224 = vld [vmem:[%s215 + $0x8] sm:$0xff]
      %v225 = vld [vmem:[%s1] sm:$0xff]
      %v226 = vld [vmem:[%s1 + $0x8] sm:$0xff]
      %v227 = vld [vmem:[%s1 + $0x10] sm:$0xff]
      %v228 = vld [vmem:[%s1 + $0x18] sm:$0xff]
      %v229 = vld [vmem:[%s1 + $0x20] sm:$0xff]
      %v230 = vld [vmem:[%s1 + $0x28] sm:$0xff]
      %v231 = vld [vmem:[%s1 + $0x30] sm:$0xff]
      %v232 = vld [vmem:[%s1 + $0x38] sm:$0xff]
      %v233 = vld [vmem:[%s1 + $0x40] sm:$0xff]
      %v234 = vld [vmem:[%s1 + $0x48] sm:$0xff]
      %v235 = vld [vmem:[%s1 + $0x50] sm:$0xff]
      %v236 = vld [vmem:[%s1 + $0x58] sm:$0xff]
      %v237 = vld [vmem:[%s1 + $0x60] sm:$0xff]
      %v238 = vld [vmem:[%s1 + $0x68] sm:$0xff]
      %v239 = vld [vmem:[%s1 + $0x70] sm:$0xff]
      %v240 = vld [vmem:[%s1 + $0x78] sm:$0xff]
      %v241 = vld [vmem:[%s2] sm:$0x1]
      %v243 = vlaneseq
      %v244 = vshrl.u32 %v243, 7
      %v245 = vsub.s32 0, %v244
      %v246 = vrot.slane %v241, %v245
      %248 = vmatprep.subr.mxu0 0.0
      %249 = vmatpush1.msra.mxu0 %v225
      %250 = vmatprep.subr.mxu0 0.0
      %251 = vmatpush1.msra.mxu0 %v226
      %252 = vmatprep.subr.mxu0 0.0
      %253 = vmatpush1.msra.mxu0 %v227
      %254 = vmatprep.subr.mxu0 0.0
      %255 = vmatpush1.msra.mxu0 %v228
      %256 = vmatprep.subr.mxu0 0.0
      %257 = vmatpush1.msra.mxu0 %v229
      %258 = vmatprep.subr.mxu0 0.0
      %259 = vmatpush1.msra.mxu0 %v230
      %260 = vmatprep.subr.mxu0 0.0
      %261 = vmatpush1.msra.mxu0 %v231
      %262 = vmatprep.subr.mxu0 0.0
      %263 = vmatpush1.msra.mxu0 %v232
      %264 = vmatprep.subr.mxu0 0.0
      %265 = vmatpush1.msra.mxu0 %v233
      %266 = vmatprep.subr.mxu0 0.0
      %267 = vmatpush1.msra.mxu0 %v234
      %268 = vmatprep.subr.mxu0 0.0
      %269 = vmatpush1.msra.mxu0 %v235
      %270 = vmatprep.subr.mxu0 0.0
      %271 = vmatpush1.msra.mxu0 %v236
      %272 = vmatprep.subr.mxu0 0.0
      %273 = vmatpush1.msra.mxu0 %v237
      %274 = vmatprep.subr.mxu0 0.0
      %275 = vmatpush1.msra.mxu0 %v238
      %276 = vmatprep.subr.mxu0 0.0
      %277 = vmatpush1.msra.mxu0 %v239
      %278 = vmatprep.subr.mxu0 0.0
      %279 = vmatpush1.msra.mxu0 %v240
      %280 = vmatprep.subr.mxu0 0.0
      %281 = vmatpush1.msra.mxu0 0.0
      %282 = vmatprep.subr.mxu0 0.0
      %283 = vmatpush1.msra.mxu0 0.0
      %284 = vmatprep.subr.mxu0 0.0
      %285 = vmatpush1.msra.mxu0 0.0
      %286 = vmatprep.subr.mxu0 0.0
      %287 = vmatpush1.msra.mxu0 0.0
      %288 = vmatprep.subr.mxu0 0.0
      %289 = vmatpush1.msra.mxu0 0.0
      %290 = vmatprep.subr.mxu0 0.0
      %291 = vmatpush1.msra.mxu0 0.0
      %292 = vmatprep.subr.mxu0 0.0
      %293 = vmatpush1.msra.mxu0 0.0
      %294 = vmatprep.subr.mxu0 0.0
      %295 = vmatpush1.msra.mxu0 0.0
      %296 = vmatprep.subr.mxu0 0.0
      %297 = vmatpush1.msra.mxu0 0.0
      %298 = vmatprep.subr.mxu0 0.0
      %299 = vmatpush1.msra.mxu0 0.0
      %300 = vmatprep.subr.mxu0 0.0
      %301 = vmatpush1.msra.mxu0 0.0
      %302 = vmatprep.subr.mxu0 0.0
      %303 = vmatpush1.msra.mxu0 0.0
      %304 = vmatprep.subr.mxu0 0.0
      %305 = vmatpush1.msra.mxu0 0.0
      %306 = vmatprep.subr.mxu0 0.0
      %307 = vmatpush1.msra.mxu0 0.0
      %308 = vmatprep.subr.mxu0 0.0
      %309 = vmatpush1.msra.mxu0 0.0
      %310 = vmatprep.subr.mxu0 0.0
      %311 = vmatpush1.msra.mxu0 0.0
      %312 = vmatprep.mubr.f32.mxu0 0.0
      %313 = vmatmul.mubr.f32.gmra.mrb[0].mxu0 %v223
      %v314 = vpop.f32.mrb[0].mxu0
      %v315 = vadd.f32 %v246, %v314
      %v316 = vpop.f32.mrb[0].mxu0
      %317 = vmatprep.mubr.f32.mxu0 0.0
      %318 = vmatmul.mubr.f32.gmra.mrb[0].mxu0 %v224
      %v319 = vpop.f32.mrb[0].mxu0
      %v320 = vadd.f32 %v246, %v319
      %v321 = vpop.f32.mrb[0].mxu0
      %322 = vdwg.mxu0
      %323 = vst [vmem:[%s221] sm:$0xff] %v315
      %324 = vst [vmem:[%s221 + $0x8] sm:$0xff] %v320
      %s325 = smul.u32 %s17, 16
      %s326 = ssub.s32 40, %s325
      %p327 = scmp.lt.s32.totalorder %s326, 16
      %s328 = scalar_select %p327, %s326, 16
      %v329 = vlaneseq
      %v330 = vshrl.u32 %v329, 7
      %v331 = vadd.s32 %v330, 8
      %v332 = vstv %s328
      %vm333 = vcmp.lt.s32.totalorder %v330, %v332
      %vm334 = vcmp.lt.s32.totalorder %v331, %v332
      %v335 = vsel %vm333, 1, 0
      %v336 = vsel %vm334, 1, 0
      %vm337 = vcmp.eq.s32.totalorder %v335, 1
      %vm338 = vcmp.eq.s32.totalorder %v336, 1
      %v339 = vsel %vm337, %v315, 0.0
      %v340 = vsel %vm338, %v320, 0.0
      %p341 = scmp.eq.s32.totalorder %s17, 0
      // Predicated region
      $region33: #{fcn_forward.4} parent=31 // pred_check
        %p342 = pneg %p341
      $region34: #{fcn_forward.4} parent=31 // pred_check_branch
        %344 = sbr.rel (%p342) target = $region36
      $region35: #{fcn_forward.4} parent=31 // pred_region
        %345 = vst [vmem:[%s4] sm:$0x1] 0.0
        %346 = vst [vmem:[%s5] sm:$0x1] 0.0
      $region36: #{fcn_forward.4} parent=31 // pred_fallthru
        _
      %v347 = vld [vmem:[%s4] sm:$0x1]
      %v348 = vadd.f32 %v339, %v340
      %v349 = vrot.slane %v348, 4
      %v350 = vadd.f32 %v348, %v349
      %v351 = vrot.slane %v350, 2
      %v352 = vadd.f32 %v350, %v351
      %v353 = vrot.slane %v352, 1
      %v354 = vadd.f32 %v352, %v353
      %v355 = vadd.f32 %v347, %v354
      %356 = vst [vmem:[%s4] sm:$0x1] %v355
      %v357 = vld [vmem:[%s5] sm:$0x1]
      %v358 = vmul.f32 %v339, %v339
      %v359 = vmul.f32 %v340, %v340
      %v360 = vadd.f32 %v358, %v359
      %v361 = vrot.slane %v360, 4
      %v362 = vadd.f32 %v360, %v361
      %v363 = vrot.slane %v362, 2
      %v364 = vadd.f32 %v362, %v363
      %v365 = vrot.slane %v364, 1
      %v366 = vadd.f32 %v364, %v365
      %v367 = vadd.f32 %v357, %v366
      %368 = vst [vmem:[%s5] sm:$0x1] %v367
      %s369 = smul.u32 2, %s17
      %p370 = scmp.lt.s32.totalorder %s369, 5
      %s371 = scalar_select %p370, %s369, 5
      %s372 = smul.addr %s371, 8
      %s373 = scalar_lea.vmem %s3, %s372
      // Predicated region
      $region37: #{fcn_forward.4} parent=31 // pred_check
        %p374 = pneg %p103
      $region38: #{fcn_forward.4} parent=31 // pred_check_branch
        %376 = sbr.rel (%p374) target = $region40
      $region39: #{fcn_forward.4} parent=31 // pred_region
        %s377 = smul.u32 2, %s17
      $region40: #{fcn_forward.4} parent=31 // pred_fallthru
        _
      // Predicated region
      $region41: #{fcn_forward.4} parent=31 // pred_check
        %p378 = pneg %p124
      $region42: #{fcn_forward.4} parent=31 // pred_check_branch
        %380 = sbr.rel (%p378) target = $region44
      $region43: #{fcn_forward.4} parent=31 // pred_region
        _
      $region44: #{fcn_forward.4} parent=31 // pred_fallthru
        _
      // Predicated region
      $region45: #{fcn_forward.4} parent=31 // pred_check
        %p381 = pneg %p145
      $region46: #{fcn_forward.4} parent=31 // pred_check_branch
        %383 = sbr.rel (%p381) target = $region48
      $region47: #{fcn_forward.4} parent=31 // pred_region
        _
      $region48: #{fcn_forward.4} parent=31 // pred_fallthru
        _
      // Predicated region
      $region49: #{fcn_forward.4} parent=31 // pred_check
        %p384 = pneg %p124
      $region50: #{fcn_forward.4} parent=31 // pred_check_branch
        %386 = sbr.rel (%p384) target = $region52
      $region51: #{fcn_forward.4} parent=31 // pred_region
        _
      $region52: #{fcn_forward.4} parent=31 // pred_fallthru
        _
      // Predicated region
      $region53: #{fcn_forward.4} parent=31 // pred_check
        %p387 = pneg %p145
      $region54: #{fcn_forward.4} parent=31 // pred_check_branch
        %389 = sbr.rel (%p387) target = $region56
      $region55: #{fcn_forward.4} parent=31 // pred_region
        _
      $region56: #{fcn_forward.4} parent=31 // pred_fallthru
        _
    $region32: #{fcn_forward.4} parent=5 // pred_fallthru
      _
    %p390 = scmp.le.s32.totalorder 2, %s12
    // Predicated region
    $region57: #{fcn_forward.4} parent=5 // pred_check
      %p391 = pneg %p390
    $region58: #{fcn_forward.4} parent=5 // pred_check_branch
      %393 = sbr.rel (%p391) target = $region60
    $region59: #{fcn_forward.4} parent=5 // pred_region
      %s394 = ssub.s32 %s12, 2
      // Predicated region
      $region61: #{fcn_forward.4} parent=59 // pred_check
        %p395 = pneg %p109
      $region62: #{fcn_forward.4} parent=59 // pred_check_branch
        %397 = sbr.rel (%p395) target = $region64
      $region63: #{fcn_forward.4} parent=59 // pred_region
        %s398 = smul.u32 2, %s18
        %p399 = scmp.lt.s32.totalorder %s398, 5
        %s400 = scalar_select %p399, %s398, 5
        %s401 = smul.addr %s400, 8
        %s402 = scalar_lea.vmem %s3, %s401
      $region64: #{fcn_forward.4} parent=59 // pred_fallthru
        _
    $region60: #{fcn_forward.4} parent=5 // pred_fallthru
      _
  $region6: #{fcn_forward.4} parent=0 // loop_footer
    %s16 = sadd.s32 1, %s12
  $region7: #{fcn_forward.4} parent=0 // loop_footer_branch
    %11 = sbr.rel target = $region3
  $region8: #{fcn_forward.4} parent=0 // loop_exit
    _

// kernel: fcn_forward.5
$region0: #{fcn_forward.5}
  #allocation0 [shape = 'u32[]', space=smem, size = 0x4, offset = 0x4, fixed_abs, tag = 'smem constant byte address 0x4 - core index']
  #allocation1 [shape = 'u32[144,128]{1,0:T(1,128)}', space=vmem, size = 0x12000, scoped, tag = 'internal scratch']
  %s0 = inlined_call_operand.vmem [shape: f32[48,128], index: 0, kind: input, shape index: {}]
  %s1 = inlined_call_operand.vmem [shape: f32[1,128], index: 1, kind: input, shape index: {}]
  %s2 = inlined_call_operand.vmem [shape: f32[1,128], index: 2, kind: input, shape index: {}]
  %s3 = inlined_call_operand.vmem [shape: f32[128,128], index: 3, kind: input, shape index: {}]
  %s4 = inlined_call_operand.vmem [shape: f32[1,128], index: 4, kind: input, shape index: {}]
  %s5 = inlined_call_operand.vmem [shape: f32[48,128], index: 5, kind: output, shape index: {0}]
  %s6 = inlined_call_operand.vmem [shape: f32[1,128], index: 6, kind: output, shape index: {1}]
  %s7 = inlined_call_operand.vmem [shape: f32[1,128], index: 7, kind: output, shape index: {2}]
  %8 = xla_tuple %s5, %s6, %s7
  %s9 = sld [smem:[#allocation0]]
  $region73: #{fcn_forward.5} parent=0
    _
  %s11 = ssub.s32 1, %s9
  %s12 = scalar_select 0, %s11, %s9
  loop: start=0, step=1, limit=5
  $region2: #{fcn_forward.5} parent=0 // loop_pre_header
    _
  $region3: #{fcn_forward.5} parent=0 // loop_header
    %s14 = sphi 0, %s18
    %p15 = scmp.ge.s32.totalorder %s14, 5
    %s24 = sphi 0, %s26
    %s27 = sphi 0, %s24
    %s28 = sphi 0, %s27
    %s44 = sphi 0, %s28
    %s48 = sphi 0, %s48
    %s50 = sphi 0, %s48
    %s51 = sphi 0, %s50
    %s65 = sphi 0, %s51
    %s69 = sphi 0, %s69
    %s71 = sphi 0, %s69
    %s72 = sphi 0, %s71
    %s86 = sphi 0, %s72
    %s90 = sphi 0, %s90
    %s92 = sphi 0, %s90
    %s93 = sphi 0, %s92
    %s107 = sphi 0, %s93
    %s111 = sphi 0, %s111
    %s113 = sphi 0, %s111
    %s114 = sphi 0, %s113
    %s128 = sphi 0, %s114
    %s134 = sphi 0, %s136
    %s137 = sphi 0, %s134
    %s138 = sphi 0, %s137
    %s154 = sphi 0, %s138
    %s158 = sphi 0, %s158
    %s160 = sphi 0, %s158
    %s161 = sphi 0, %s160
    %s175 = sphi 0, %s161
    %s179 = sphi 0, %s179
    %s181 = sphi 0, %s179
    %s182 = sphi 0, %s181
    %s196 = sphi 0, %s182
  $region4: #{fcn_forward.5} parent=0 // loop_header_branch
    %17 = sbr.rel (%p15) target = $region8
  $region5: #{fcn_forward.5} parent=0 // loop_body
    %s19 = ssub.s32 %s14, 1
    %s20 = ssub.s32 %s14, 2
    %s21 = sadd.s32 %s14, 1
    %s22 = ssub.s32 %s14, %s21
    %p23 = scmp.eq.s32.totalorder %s22, 0
    %s25 = sadd.s32 %s24, 1
    %s26 = scalar_select %p23, %s24, %s25
    %p29 = pneg %p23
    %p30 = scmp.eq.s32.totalorder %s14, 2
    %p31 = por %p29, %p30
    %p32 = scmp.ne.s32.totalorder %s24, %s27
    %p33 = scmp.eq.s32.totalorder %s14, 0
    %p34 = por %p32, %p33
    %p35 = scmp.ne.s32.totalorder %s24, %s27
    %p36 = scmp.eq.s32.totalorder %s19, 2
    %p37 = por %p35, %p36
    %p38 = scmp.ne.s32.totalorder %s27, %s28
    %p39 = scmp.eq.s32.totalorder %s19, 0
    %p40 = por %p38, %p39
    %p41 = scmp.ne.s32.totalorder %s27, %s28
    %p42 = scmp.eq.s32.totalorder %s20, 2
    %p43 = por %p41, %p42
    %p45 = scmp.ne.s32.totalorder %s28, %s44
    %p46 = scmp.eq.s32.totalorder %s20, 0
    %p47 = por %p45, %p46
    %s49 = sadd.s32 %s48, 1
    %p52 = scmp.eq.s32.totalorder %s14, 2
    %p53 = scmp.ne.s32.totalorder %s48, %s50
    %p54 = scmp.eq.s32.totalorder %s14, 0
    %p55 = por %p53, %p54
    %p56 = scmp.ne.s32.totalorder %s48, %s50
    %p57 = scmp.eq.s32.totalorder %s19, 2
    %p58 = por %p56, %p57
    %p59 = scmp.ne.s32.totalorder %s50, %s51
    %p60 = scmp.eq.s32.totalorder %s19, 0
    %p61 = por %p59, %p60
    %p62 = scmp.ne.s32.totalorder %s50, %s51
    %p63 = scmp.eq.s32.totalorder %s20, 2
    %p64 = por %p62, %p63
    %p66 = scmp.ne.s32.totalorder %s51, %s65
    %p67 = scmp.eq.s32.totalorder %s20, 0
    %p68 = por %p66, %p67
    %s70 = sadd.s32 %s69, 1
    %p73 = scmp.eq.s32.totalorder %s14, 2
    %p74 = scmp.ne.s32.totalorder %s69, %s71
    %p75 = scmp.eq.s32.totalorder %s14, 0
    %p76 = por %p74, %p75
    %p77 = scmp.ne.s32.totalorder %s69, %s71
    %p78 = scmp.eq.s32.totalorder %s19, 2
    %p79 = por %p77, %p78
    %p80 = scmp.ne.s32.totalorder %s71, %s72
    %p81 = scmp.eq.s32.totalorder %s19, 0
    %p82 = por %p80, %p81
    %p83 = scmp.ne.s32.totalorder %s71, %s72
    %p84 = scmp.eq.s32.totalorder %s20, 2
    %p85 = por %p83, %p84
    %p87 = scmp.ne.s32.totalorder %s72, %s86
    %p88 = scmp.eq.s32.totalorder %s20, 0
    %p89 = por %p87, %p88
    %s91 = sadd.s32 %s90, 1
    %p94 = scmp.eq.s32.totalorder %s14, 2
    %p95 = scmp.ne.s32.totalorder %s90, %s92
    %p96 = scmp.eq.s32.totalorder %s14, 0
    %p97 = por %p95, %p96
    %p98 = scmp.ne.s32.totalorder %s90, %s92
    %p99 = scmp.eq.s32.totalorder %s19, 2
    %p100 = por %p98, %p99
    %p101 = scmp.ne.s32.totalorder %s92, %s93
    %p102 = scmp.eq.s32.totalorder %s19, 0
    %p103 = por %p101, %p102
    %p104 = scmp.ne.s32.totalorder %s92, %s93
    %p105 = scmp.eq.s32.totalorder %s20, 2
    %p106 = por %p104, %p105
    %p108 = scmp.ne.s32.totalorder %s93, %s107
    %p109 = scmp.eq.s32.totalorder %s20, 0
    %p110 = por %p108, %p109
    %s112 = sadd.s32 %s111, 1
    %p115 = scmp.eq.s32.totalorder %s14, 2
    %p116 = scmp.ne.s32.totalorder %s111, %s113
    %p117 = scmp.eq.s32.totalorder %s14, 0
    %p118 = por %p116, %p117
    %p119 = scmp.ne.s32.totalorder %s111, %s113
    %p120 = scmp.eq.s32.totalorder %s19, 2
    %p121 = por %p119, %p120
    %p122 = scmp.ne.s32.totalorder %s113, %s114
    %p123 = scmp.eq.s32.totalorder %s19, 0
    %p124 = por %p122, %p123
    %p125 = scmp.ne.s32.totalorder %s113, %s114
    %p126 = scmp.eq.s32.totalorder %s20, 2
    %p127 = por %p125, %p126
    %p129 = scmp.ne.s32.totalorder %s114, %s128
    %p130 = scmp.eq.s32.totalorder %s20, 0
    %p131 = por %p129, %p130
    %s132 = ssub.s32 %s14, %s21
    %p133 = scmp.eq.s32.totalorder %s132, 0
    %s135 = sadd.s32 %s134, 1
    %s136 = scalar_select %p133, %s134, %s135
    %p139 = pneg %p133
    %p140 = scmp.eq.s32.totalorder %s14, 2
    %p141 = por %p139, %p140
    %p142 = scmp.ne.s32.totalorder %s134, %s137
    %p143 = scmp.eq.s32.totalorder %s14, 0
    %p144 = por %p142, %p143
    %p145 = scmp.ne.s32.totalorder %s134, %s137
    %p146 = scmp.eq.s32.totalorder %s19, 2
    %p147 = por %p145, %p146
    %p148 = scmp.ne.s32.totalorder %s137, %s138
    %p149 = scmp.eq.s32.totalorder %s19, 0
    %p150 = por %p148, %p149
    %p151 = scmp.ne.s32.totalorder %s137, %s138
    %p152 = scmp.eq.s32.totalorder %s20, 2
    %p153 = por %p151, %p152
    %p155 = scmp.ne.s32.totalorder %s138, %s154
    %p156 = scmp.eq.s32.totalorder %s20, 0
    %p157 = por %p155, %p156
    %s159 = sadd.s32 %s158, 1
    %p162 = scmp.eq.s32.totalorder %s14, 2
    %p163 = scmp.ne.s32.totalorder %s158, %s160
    %p164 = scmp.eq.s32.totalorder %s14, 0
    %p165 = por %p163, %p164
    %p166 = scmp.ne.s32.totalorder %s158, %s160
    %p167 = scmp.eq.s32.totalorder %s19, 2
    %p168 = por %p166, %p167
    %p169 = scmp.ne.s32.totalorder %s160, %s161
    %p170 = scmp.eq.s32.totalorder %s19, 0
    %p171 = por %p169, %p170
    %p172 = scmp.ne.s32.totalorder %s160, %s161
    %p173 = scmp.eq.s32.totalorder %s20, 2
    %p174 = por %p172, %p173
    %p176 = scmp.ne.s32.totalorder %s161, %s175
    %p177 = scmp.eq.s32.totalorder %s20, 0
    %p178 = por %p176, %p177
    %s180 = sadd.s32 %s179, 1
    %p183 = scmp.eq.s32.totalorder %s14, 2
    %p184 = scmp.ne.s32.totalorder %s179, %s181
    %p185 = scmp.eq.s32.totalorder %s14, 0
    %p186 = por %p184, %p185
    %p187 = scmp.ne.s32.totalorder %s179, %s181
    %p188 = scmp.eq.s32.totalorder %s19, 2
    %p189 = por %p187, %p188
    %p190 = scmp.ne.s32.totalorder %s181, %s182
    %p191 = scmp.eq.s32.totalorder %s19, 0
    %p192 = por %p190, %p191
    %p193 = scmp.ne.s32.totalorder %s181, %s182
    %p194 = scmp.eq.s32.totalorder %s20, 2
    %p195 = por %p193, %p194
    %p197 = scmp.ne.s32.totalorder %s182, %s196
    %p198 = scmp.eq.s32.totalorder %s20, 0
    %p199 = por %p197, %p198
    %p200 = scmp.le.s32.totalorder 1, %s14
    %p201 = scmp.lt.s32.totalorder %s14, 4
    %p202 = pnand %p200, %p201
    %p203 = pneg %p202
    // Predicated region
    $region9: #{fcn_forward.5} parent=5 // pred_check
      _
    $region10: #{fcn_forward.5} parent=5 // pred_check_branch
      %205 = sbr.rel (%p202) target = $region12
    $region11: #{fcn_forward.5} parent=5 // pred_region
      %s206 = ssub.s32 %s14, 1
      // Predicated region
      $region13: #{fcn_forward.5} parent=11 // pred_check
        %p207 = pneg %p61
      $region14: #{fcn_forward.5} parent=11 // pred_check_branch
        %209 = sbr.rel (%p207) target = $region16
      $region15: #{fcn_forward.5} parent=11 // pred_region
        _
      $region16: #{fcn_forward.5} parent=11 // pred_fallthru
        _
      // Predicated region
      $region17: #{fcn_forward.5} parent=11 // pred_check
        %p210 = pneg %p82
      $region18: #{fcn_forward.5} parent=11 // pred_check_branch
        %212 = sbr.rel (%p210) target = $region20
      $region19: #{fcn_forward.5} parent=11 // pred_region
        _
      $region20: #{fcn_forward.5} parent=11 // pred_fallthru
        _
      // Predicated region
      $region21: #{fcn_forward.5} parent=11 // pred_check
        %p213 = pneg %p103
      $region22: #{fcn_forward.5} parent=11 // pred_check_branch
        %215 = sbr.rel (%p213) target = $region24
      $region23: #{fcn_forward.5} parent=11 // pred_region
        _
      $region24: #{fcn_forward.5} parent=11 // pred_fallthru
        _
      // Predicated region
      $region25: #{fcn_forward.5} parent=11 // pred_check
        %p216 = pneg %p124
      $region26: #{fcn_forward.5} parent=11 // pred_check_branch
        %218 = sbr.rel (%p216) target = $region28
      $region27: #{fcn_forward.5} parent=11 // pred_region
        _
      $region28: #{fcn_forward.5} parent=11 // pred_fallthru
        _
    $region12: #{fcn_forward.5} parent=5 // pred_fallthru
      _
    %p219 = scmp.lt.s32.totalorder %s14, 3
    // Predicated region
    $region29: #{fcn_forward.5} parent=5 // pred_check
      %p220 = pneg %p219
    $region30: #{fcn_forward.5} parent=5 // pred_check_branch
      %222 = sbr.rel (%p220) target = $region32
    $region31: #{fcn_forward.5} parent=5 // pred_region
      // Predicated region
      $region33: #{fcn_forward.5} parent=31 // pred_check
        %p223 = pneg %p34
      $region34: #{fcn_forward.5} parent=31 // pred_check_branch
        %225 = sbr.rel (%p223) target = $region36
      $region35: #{fcn_forward.5} parent=31 // pred_region
        %s226 = smul.u32 2, %s14
        %p227 = scmp.lt.s32.totalorder %s226, 5
        %s228 = scalar_select %p227, %s226, 5
        %s229 = smul.addr %s228, 8
        %s230 = scalar_lea.vmem %s0, %s229
        %s231 = smul.u32 2, %s14
      $region36: #{fcn_forward.5} parent=31 // pred_fallthru
        _
    $region32: #{fcn_forward.5} parent=5 // pred_fallthru
      _
    %p232 = scmp.le.s32.totalorder 1, %s14
    %p233 = scmp.lt.s32.totalorder %s14, 4
    %p234 = pnand %p232, %p233
    %p235 = pneg %p234
    // Predicated region
    $region37: #{fcn_forward.5} parent=5 // pred_check
      _
    $region38: #{fcn_forward.5} parent=5 // pred_check_branch
      %237 = sbr.rel (%p234) target = $region40
    $region39: #{fcn_forward.5} parent=5 // pred_region
      %s238 = ssub.s32 %s14, 1
      %s239 = smul.u32 2, %s19
      %p240 = scmp.lt.s32.totalorder %s239, 5
      %s241 = scalar_select %p240, %s239, 5
      %s242 = smul.addr %s241, 8
      %s243 = scalar_lea.vmem %s0, %s242
      %p244 = pneg %p40
      %p245 = pneg %p37
      %p246 = pneg %p61
      %p247 = pneg %p58
      %p248 = pneg %p82
      %p249 = pneg %p79
      %p250 = pneg %p103
      %p251 = pneg %p100
      %p252 = pneg %p124
      %p253 = pneg %p121
      %p254 = pneg %p150
      %p255 = pneg %p147
      %s256 = smul.u32 2, %s19
      %p257 = scmp.lt.s32.totalorder %s256, 5
      %s258 = scalar_select %p257, %s256, 5
      %s259 = smul.addr %s258, 8
      %s260 = scalar_lea.vmem %s5, %s259
      %p261 = pneg %p171
      %p262 = pneg %p168
      %p263 = pneg %p192
      %p264 = pneg %p189
      %s265 = smul.u32 2, %s19
      %p266 = scmp.lt.s32.totalorder %s265, 5
      %s267 = scalar_select %p266, %s265, 5
      %s268 = smul.addr %s267, 8
      %s269 = scalar_lea.vmem %s0, %s268
      %s270 = smul.u32 2, %s19
      %s271 = smul.u32 2, %s19
      %p272 = scmp.lt.s32.totalorder %s271, 5
      %s273 = scalar_select %p272, %s271, 5
      %s274 = smul.addr %s273, 8
      %s275 = scalar_lea.vmem %s5, %s274
      %s276 = smul.u32 2, %s19
      %v277 = vld [vmem:[%s269] sm:$0xff]
      %v278 = vld [vmem:[%s269 + $0x8] sm:$0xff]
      %v279 = vld [vmem:[%s1] sm:$0x1]
      %v281 = vlaneseq
      %v282 = vshrl.u32 %v281, 7
      %v283 = vsub.s32 0, %v282
      %v284 = vrot.slane %v279, %v283
      %v286 = vmul.f32 %v277, %v284
      %v287 = vmul.f32 %v278, %v284
      %v288 = vld [vmem:[%s2] sm:$0x1]
      %v290 = vlaneseq
      %v291 = vshrl.u32 %v290, 7
      %v292 = vsub.s32 0, %v291
      %v293 = vrot.slane %v288, %v292
      %v295 = vadd.f32 %v286, %v293
      %v296 = vadd.f32 %v287, %v293
      %v297 = vmax.f32 %v295, 0.0
      %v298 = vmax.f32 %v296, 0.0
      %v299 = vld [vmem:[%s3] sm:$0xff]
      %v300 = vld [vmem:[%s3 + $0x8] sm:$0xff]
      %v301 = vld [vmem:[%s3 + $0x10] sm:$0xff]
      %v302 = vld [vmem:[%s3 + $0x18] sm:$0xff]
      %v303 = vld [vmem:[%s3 + $0x20] sm:$0xff]
      %v304 = vld [vmem:[%s3 + $0x28] sm:$0xff]
      %v305 = vld [vmem:[%s3 + $0x30] sm:$0xff]
      %v306 = vld [vmem:[%s3 + $0x38] sm:$0xff]
      %v307 = vld [vmem:[%s3 + $0x40] sm:$0xff]
      %v308 = vld [vmem:[%s3 + $0x48] sm:$0xff]
      %v309 = vld [vmem:[%s3 + $0x50] sm:$0xff]
      %v310 = vld [vmem:[%s3 + $0x58] sm:$0xff]
      %v311 = vld [vmem:[%s3 + $0x60] sm:$0xff]
      %v312 = vld [vmem:[%s3 + $0x68] sm:$0xff]
      %v313 = vld [vmem:[%s3 + $0x70] sm:$0xff]
      %v314 = vld [vmem:[%s3 + $0x78] sm:$0xff]
      %v315 = vld [vmem:[%s4] sm:$0x1]
      %v317 = vlaneseq
      %v318 = vshrl.u32 %v317, 7
      %v319 = vsub.s32 0, %v318
      %v320 = vrot.slane %v315, %v319
      %322 = vmatprep.subr.mxu0 0.0
      %323 = vmatpush1.msra.mxu0 %v299
      %324 = vmatprep.subr.mxu0 0.0
      %325 = vmatpush1.msra.mxu0 %v300
      %326 = vmatprep.subr.mxu0 0.0
      %327 = vmatpush1.msra.mxu0 %v301
      %328 = vmatprep.subr.mxu0 0.0
      %329 = vmatpush1.msra.mxu0 %v302
      %330 = vmatprep.subr.mxu0 0.0
      %331 = vmatpush1.msra.mxu0 %v303
      %332 = vmatprep.subr.mxu0 0.0
      %333 = vmatpush1.msra.mxu0 %v304
      %334 = vmatprep.subr.mxu0 0.0
      %335 = vmatpush1.msra.mxu0 %v305
      %336 = vmatprep.subr.mxu0 0.0
      %337 = vmatpush1.msra.mxu0 %v306
      %338 = vmatprep.subr.mxu0 0.0
      %339 = vmatpush1.msra.mxu0 %v307
      %340 = vmatprep.subr.mxu0 0.0
      %341 = vmatpush1.msra.mxu0 %v308
      %342 = vmatprep.subr.mxu0 0.0
      %343 = vmatpush1.msra.mxu0 %v309
      %344 = vmatprep.subr.mxu0 0.0
      %345 = vmatpush1.msra.mxu0 %v310
      %346 = vmatprep.subr.mxu0 0.0
      %347 = vmatpush1.msra.mxu0 %v311
      %348 = vmatprep.subr.mxu0 0.0
      %349 = vmatpush1.msra.mxu0 %v312
      %350 = vmatprep.subr.mxu0 0.0
      %351 = vmatpush1.msra.mxu0 %v313
      %352 = vmatprep.subr.mxu0 0.0
      %353 = vmatpush1.msra.mxu0 %v314
      %354 = vmatprep.subr.mxu0 0.0
      %355 = vmatpush1.msra.mxu0 0.0
      %356 = vmatprep.subr.mxu0 0.0
      %357 = vmatpush1.msra.mxu0 0.0
      %358 = vmatprep.subr.mxu0 0.0
      %359 = vmatpush1.msra.mxu0 0.0
      %360 = vmatprep.subr.mxu0 0.0
      %361 = vmatpush1.msra.mxu0 0.0
      %362 = vmatprep.subr.mxu0 0.0
      %363 = vmatpush1.msra.mxu0 0.0
      %364 = vmatprep.subr.mxu0 0.0
      %365 = vmatpush1.msra.mxu0 0.0
      %366 = vmatprep.subr.mxu0 0.0
      %367 = vmatpush1.msra.mxu0 0.0
      %368 = vmatprep.subr.mxu0 0.0
      %369 = vmatpush1.msra.mxu0 0.0
      %370 = vmatprep.subr.mxu0 0.0
      %371 = vmatpush1.msra.mxu0 0.0
      %372 = vmatprep.subr.mxu0 0.0
      %373 = vmatpush1.msra.mxu0 0.0
      %374 = vmatprep.subr.mxu0 0.0
      %375 = vmatpush1.msra.mxu0 0.0
      %376 = vmatprep.subr.mxu0 0.0
      %377 = vmatpush1.msra.mxu0 0.0
      %378 = vmatprep.subr.mxu0 0.0
      %379 = vmatpush1.msra.mxu0 0.0
      %380 = vmatprep.subr.mxu0 0.0
      %381 = vmatpush1.msra.mxu0 0.0
      %382 = vmatprep.subr.mxu0 0.0
      %383 = vmatpush1.msra.mxu0 0.0
      %384 = vmatprep.subr.mxu0 0.0
      %385 = vmatpush1.msra.mxu0 0.0
      %386 = vmatprep.mubr.f32.mxu0 0.0
      %387 = vmatmul.mubr.f32.gmra.mrb[0].mxu0 %v297
      %v388 = vpop.f32.mrb[0].mxu0
      %v389 = vadd.f32 %v320, %v388
      %v390 = vpop.f32.mrb[0].mxu0
      %391 = vmatprep.mubr.f32.mxu0 0.0
      %392 = vmatmul.mubr.f32.gmra.mrb[0].mxu0 %v298
      %v393 = vpop.f32.mrb[0].mxu0
      %v394 = vadd.f32 %v320, %v393
      %v395 = vpop.f32.mrb[0].mxu0
      %396 = vdwg.mxu0
      %397 = vst [vmem:[%s275] sm:$0xff] %v389
      %398 = vst [vmem:[%s275 + $0x8] sm:$0xff] %v394
      %s399 = smul.u32 %s19, 16
      %s400 = ssub.s32 40, %s399
      %p401 = scmp.lt.s32.totalorder %s400, 16
      %s402 = scalar_select %p401, %s400, 16
      %v403 = vlaneseq
      %v404 = vshrl.u32 %v403, 7
      %v405 = vadd.s32 %v404, 8
      %v406 = vstv %s402
      %vm407 = vcmp.lt.s32.totalorder %v404, %v406
      %vm408 = vcmp.lt.s32.totalorder %v405, %v406
      %v409 = vsel %vm407, 1, 0
      %v410 = vsel %vm408, 1, 0
      %vm411 = vcmp.eq.s32.totalorder %v409, 1
      %vm412 = vcmp.eq.s32.totalorder %v410, 1
      %v413 = vsel %vm411, %v389, 0.0
      %v414 = vsel %vm412, %v394, 0.0
      %p415 = scmp.eq.s32.totalorder %s19, 0
      // Predicated region
      $region41: #{fcn_forward.5} parent=39 // pred_check
        %p416 = pneg %p415
      $region42: #{fcn_forward.5} parent=39 // pred_check_branch
        %418 = sbr.rel (%p416) target = $region44
      $region43: #{fcn_forward.5} parent=39 // pred_region
        %419 = vst [vmem:[%s6] sm:$0x1] 0.0
        %420 = vst [vmem:[%s7] sm:$0x1] 0.0
      $region44: #{fcn_forward.5} parent=39 // pred_fallthru
        _
      %v421 = vld [vmem:[%s6] sm:$0x1]
      %v422 = vadd.f32 %v413, %v414
      %v423 = vrot.slane %v422, 4
      %v424 = vadd.f32 %v422, %v423
      %v425 = vrot.slane %v424, 2
      %v426 = vadd.f32 %v424, %v425
      %v427 = vrot.slane %v426, 1
      %v428 = vadd.f32 %v426, %v427
      %v429 = vadd.f32 %v421, %v428
      %430 = vst [vmem:[%s6] sm:$0x1] %v429
      %v431 = vld [vmem:[%s7] sm:$0x1]
      %v432 = vmul.f32 %v413, %v413
      %v433 = vmul.f32 %v414, %v414
      %v434 = vadd.f32 %v432, %v433
      %v435 = vrot.slane %v434, 4
      %v436 = vadd.f32 %v434, %v435
      %v437 = vrot.slane %v436, 2
      %v438 = vadd.f32 %v436, %v437
      %v439 = vrot.slane %v438, 1
      %v440 = vadd.f32 %v438, %v439
      %v441 = vadd.f32 %v431, %v440
      %442 = vst [vmem:[%s7] sm:$0x1] %v441
      %s443 = smul.u32 2, %s19
      %p444 = scmp.lt.s32.totalorder %s443, 5
      %s445 = scalar_select %p444, %s443, 5
      %s446 = smul.addr %s445, 8
      %s447 = scalar_lea.vmem %s5, %s446
      // Predicated region
      $region45: #{fcn_forward.5} parent=39 // pred_check
        %p448 = pneg %p147
      $region46: #{fcn_forward.5} parent=39 // pred_check_branch
        %450 = sbr.rel (%p448) target = $region48
      $region47: #{fcn_forward.5} parent=39 // pred_region
        %s451 = smul.u32 2, %s19
      $region48: #{fcn_forward.5} parent=39 // pred_fallthru
        _
      // Predicated region
      $region49: #{fcn_forward.5} parent=39 // pred_check
        %p452 = pneg %p168
      $region50: #{fcn_forward.5} parent=39 // pred_check_branch
        %454 = sbr.rel (%p452) target = $region52
      $region51: #{fcn_forward.5} parent=39 // pred_region
        _
      $region52: #{fcn_forward.5} parent=39 // pred_fallthru
        _
      // Predicated region
      $region53: #{fcn_forward.5} parent=39 // pred_check
        %p455 = pneg %p189
      $region54: #{fcn_forward.5} parent=39 // pred_check_branch
        %457 = sbr.rel (%p455) target = $region56
      $region55: #{fcn_forward.5} parent=39 // pred_region
        _
      $region56: #{fcn_forward.5} parent=39 // pred_fallthru
        _
      // Predicated region
      $region57: #{fcn_forward.5} parent=39 // pred_check
        %p458 = pneg %p168
      $region58: #{fcn_forward.5} parent=39 // pred_check_branch
        %460 = sbr.rel (%p458) target = $region60
      $region59: #{fcn_forward.5} parent=39 // pred_region
        _
      $region60: #{fcn_forward.5} parent=39 // pred_fallthru
        _
      // Predicated region
      $region61: #{fcn_forward.5} parent=39 // pred_check
        %p461 = pneg %p189
      $region62: #{fcn_forward.5} parent=39 // pred_check_branch
        %463 = sbr.rel (%p461) target = $region64
      $region63: #{fcn_forward.5} parent=39 // pred_region
        _
      $region64: #{fcn_forward.5} parent=39 // pred_fallthru
        _
    $region40: #{fcn_forward.5} parent=5 // pred_fallthru
      _
    %p464 = scmp.le.s32.totalorder 2, %s14
    // Predicated region
    $region65: #{fcn_forward.5} parent=5 // pred_check
      %p465 = pneg %p464
    $region66: #{fcn_forward.5} parent=5 // pred_check_branch
      %467 = sbr.rel (%p465) target = $region68
    $region67: #{fcn_forward.5} parent=5 // pred_region
      %s468 = ssub.s32 %s14, 2
      // Predicated region
      $region69: #{fcn_forward.5} parent=67 // pred_check
        %p469 = pneg %p153
      $region70: #{fcn_forward.5} parent=67 // pred_check_branch
        %471 = sbr.rel (%p469) target = $region72
      $region71: #{fcn_forward.5} parent=67 // pred_region
        %s472 = smul.u32 2, %s20
        %p473 = scmp.lt.s32.totalorder %s472, 5
        %s474 = scalar_select %p473, %s472, 5
        %s475 = smul.addr %s474, 8
        %s476 = scalar_lea.vmem %s5, %s475
      $region72: #{fcn_forward.5} parent=67 // pred_fallthru
        _
    $region68: #{fcn_forward.5} parent=5 // pred_fallthru
      _
  $region6: #{fcn_forward.5} parent=0 // loop_footer
    %s18 = sadd.s32 1, %s14
  $region7: #{fcn_forward.5} parent=0 // loop_footer_branch
    %13 = sbr.rel target = $region3
  $region8: #{fcn_forward.5} parent=0 // loop_exit
    _

// kernel: fcn_forward.7
$region0: #{fcn_forward.7}
  #allocation0 [shape = 'u32[]', space=smem, size = 0x4, offset = 0x4, fixed_abs, tag = 'smem constant byte address 0x4 - core index']
  #allocation1 [shape = 'u32[144,128]{1,0:T(1,128)}', space=vmem, size = 0x12000, scoped, tag = 'internal scratch']
  %s0 = inlined_call_operand.vmem [shape: f32[48,128], index: 0, kind: input, shape index: {}]
  %s1 = inlined_call_operand.vmem [shape: f32[1,128], index: 1, kind: input, shape index: {}]
  %s2 = inlined_call_operand.vmem [shape: f32[1,128], index: 2, kind: input, shape index: {}]
  %s3 = inlined_call_operand.vmem [shape: f32[48,128], index: 3, kind: input, shape index: {}]
  %s4 = inlined_call_operand.vmem [shape: f32[128,128], index: 4, kind: input, shape index: {}]
  %s5 = inlined_call_operand.vmem [shape: f32[1,128], index: 5, kind: input, shape index: {}]
  %s6 = inlined_call_operand.vmem [shape: f32[128,128], index: 6, kind: input, shape index: {}]
  %s7 = inlined_call_operand.vmem [shape: f32[128,128], index: 7, kind: input, shape index: {}]
  %s8 = inlined_call_operand.vmem [shape: f32[1,128], index: 8, kind: input, shape index: {}]
  %s9 = inlined_call_operand.vmem [shape: f32[128,128], index: 9, kind: input, shape index: {}]
  %s10 = inlined_call_operand.vmem [shape: f32[1,128], index: 10, kind: input, shape index: {}]
  %s11 = inlined_call_operand.vmem [shape: f32[48,128], index: 11, kind: output, shape index: {}]
  %s12 = sld [smem:[#allocation0]]
  $region77: #{fcn_forward.7} parent=0
    _
  %s14 = ssub.s32 1, %s12
  %s15 = scalar_select 0, %s14, %s12
  loop: start=0, step=1, limit=5
  $region2: #{fcn_forward.7} parent=0 // loop_pre_header
    _
  $region3: #{fcn_forward.7} parent=0 // loop_header
    %s17 = sphi 0, %s21
    %p18 = scmp.ge.s32.totalorder %s17, 5
    %s27 = sphi 0, %s29
    %s30 = sphi 0, %s27
    %s31 = sphi 0, %s30
    %s47 = sphi 0, %s31
    %s51 = sphi 0, %s51
    %s53 = sphi 0, %s51
    %s54 = sphi 0, %s53
    %s68 = sphi 0, %s54
    %s72 = sphi 0, %s72
    %s74 = sphi 0, %s72
    %s75 = sphi 0, %s74
    %s89 = sphi 0, %s75
    %s95 = sphi 0, %s97
    %s98 = sphi 0, %s95
    %s99 = sphi 0, %s98
    %s115 = sphi 0, %s99
    %s119 = sphi 0, %s119
    %s121 = sphi 0, %s119
    %s122 = sphi 0, %s121
    %s136 = sphi 0, %s122
    %s140 = sphi 0, %s140
    %s142 = sphi 0, %s140
    %s143 = sphi 0, %s142
    %s157 = sphi 0, %s143
    %s161 = sphi 0, %s161
    %s163 = sphi 0, %s161
    %s164 = sphi 0, %s163
    %s178 = sphi 0, %s164
    %s182 = sphi 0, %s182
    %s184 = sphi 0, %s182
    %s185 = sphi 0, %s184
    %s199 = sphi 0, %s185
    %s203 = sphi 0, %s203
    %s205 = sphi 0, %s203
    %s206 = sphi 0, %s205
    %s220 = sphi 0, %s206
    %s224 = sphi 0, %s224
    %s226 = sphi 0, %s224
    %s227 = sphi 0, %s226
    %s241 = sphi 0, %s227
    %s245 = sphi 0, %s245
    %s247 = sphi 0, %s245
    %s248 = sphi 0, %s247
    %s262 = sphi 0, %s248
    %s268 = sphi 0, %s270
    %s271 = sphi 0, %s268
    %s272 = sphi 0, %s271
    %s288 = sphi 0, %s272
  $region4: #{fcn_forward.7} parent=0 // loop_header_branch
    %20 = sbr.rel (%p18) target = $region8
  $region5: #{fcn_forward.7} parent=0 // loop_body
    %s22 = ssub.s32 %s17, 1
    %s23 = ssub.s32 %s17, 2
    %s24 = sadd.s32 %s17, 1
    %s25 = ssub.s32 %s17, %s24
    %p26 = scmp.eq.s32.totalorder %s25, 0
    %s28 = sadd.s32 %s27, 1
    %s29 = scalar_select %p26, %s27, %s28
    %p32 = pneg %p26
    %p33 = scmp.eq.s32.totalorder %s17, 2
    %p34 = por %p32, %p33
    %p35 = scmp.ne.s32.totalorder %s27, %s30
    %p36 = scmp.eq.s32.totalorder %s17, 0
    %p37 = por %p35, %p36
    %p38 = scmp.ne.s32.totalorder %s27, %s30
    %p39 = scmp.eq.s32.totalorder %s22, 2
    %p40 = por %p38, %p39
    %p41 = scmp.ne.s32.totalorder %s30, %s31
    %p42 = scmp.eq.s32.totalorder %s22, 0
    %p43 = por %p41, %p42
    %p44 = scmp.ne.s32.totalorder %s30, %s31
    %p45 = scmp.eq.s32.totalorder %s23, 2
    %p46 = por %p44, %p45
    %p48 = scmp.ne.s32.totalorder %s31, %s47
    %p49 = scmp.eq.s32.totalorder %s23, 0
    %p50 = por %p48, %p49
    %s52 = sadd.s32 %s51, 1
    %p55 = scmp.eq.s32.totalorder %s17, 2
    %p56 = scmp.ne.s32.totalorder %s51, %s53
    %p57 = scmp.eq.s32.totalorder %s17, 0
    %p58 = por %p56, %p57
    %p59 = scmp.ne.s32.totalorder %s51, %s53
    %p60 = scmp.eq.s32.totalorder %s22, 2
    %p61 = por %p59, %p60
    %p62 = scmp.ne.s32.totalorder %s53, %s54
    %p63 = scmp.eq.s32.totalorder %s22, 0
    %p64 = por %p62, %p63
    %p65 = scmp.ne.s32.totalorder %s53, %s54
    %p66 = scmp.eq.s32.totalorder %s23, 2
    %p67 = por %p65, %p66
    %p69 = scmp.ne.s32.totalorder %s54, %s68
    %p70 = scmp.eq.s32.totalorder %s23, 0
    %p71 = por %p69, %p70
    %s73 = sadd.s32 %s72, 1
    %p76 = scmp.eq.s32.totalorder %s17, 2
    %p77 = scmp.ne.s32.totalorder %s72, %s74
    %p78 = scmp.eq.s32.totalorder %s17, 0
    %p79 = por %p77, %p78
    %p80 = scmp.ne.s32.totalorder %s72, %s74
    %p81 = scmp.eq.s32.totalorder %s22, 2
    %p82 = por %p80, %p81
    %p83 = scmp.ne.s32.totalorder %s74, %s75
    %p84 = scmp.eq.s32.totalorder %s22, 0
    %p85 = por %p83, %p84
    %p86 = scmp.ne.s32.totalorder %s74, %s75
    %p87 = scmp.eq.s32.totalorder %s23, 2
    %p88 = por %p86, %p87
    %p90 = scmp.ne.s32.totalorder %s75, %s89
    %p91 = scmp.eq.s32.totalorder %s23, 0
    %p92 = por %p90, %p91
    %s93 = ssub.s32 %s17, %s24
    %p94 = scmp.eq.s32.totalorder %s93, 0
    %s96 = sadd.s32 %s95, 1
    %s97 = scalar_select %p94, %s95, %s96
    %p100 = pneg %p94
    %p101 = scmp.eq.s32.totalorder %s17, 2
    %p102 = por %p100, %p101
    %p103 = scmp.ne.s32.totalorder %s95, %s98
    %p104 = scmp.eq.s32.totalorder %s17, 0
    %p105 = por %p103, %p104
    %p106 = scmp.ne.s32.totalorder %s95, %s98
    %p107 = scmp.eq.s32.totalorder %s22, 2
    %p108 = por %p106, %p107
    %p109 = scmp.ne.s32.totalorder %s98, %s99
    %p110 = scmp.eq.s32.totalorder %s22, 0
    %p111 = por %p109, %p110
    %p112 = scmp.ne.s32.totalorder %s98, %s99
    %p113 = scmp.eq.s32.totalorder %s23, 2
    %p114 = por %p112, %p113
    %p116 = scmp.ne.s32.totalorder %s99, %s115
    %p117 = scmp.eq.s32.totalorder %s23, 0
    %p118 = por %p116, %p117
    %s120 = sadd.s32 %s119, 1
    %p123 = scmp.eq.s32.totalorder %s17, 2
    %p124 = scmp.ne.s32.totalorder %s119, %s121
    %p125 = scmp.eq.s32.totalorder %s17, 0
    %p126 = por %p124, %p125
    %p127 = scmp.ne.s32.totalorder %s119, %s121
    %p128 = scmp.eq.s32.totalorder %s22, 2
    %p129 = por %p127, %p128
    %p130 = scmp.ne.s32.totalorder %s121, %s122
    %p131 = scmp.eq.s32.totalorder %s22, 0
    %p132 = por %p130, %p131
    %p133 = scmp.ne.s32.totalorder %s121, %s122
    %p134 = scmp.eq.s32.totalorder %s23, 2
    %p135 = por %p133, %p134
    %p137 = scmp.ne.s32.totalorder %s122, %s136
    %p138 = scmp.eq.s32.totalorder %s23, 0
    %p139 = por %p137, %p138
    %s141 = sadd.s32 %s140, 1
    %p144 = scmp.eq.s32.totalorder %s17, 2
    %p145 = scmp.ne.s32.totalorder %s140, %s142
    %p146 = scmp.eq.s32.totalorder %s17, 0
    %p147 = por %p145, %p146
    %p148 = scmp.ne.s32.totalorder %s140, %s142
    %p149 = scmp.eq.s32.totalorder %s22, 2
    %p150 = por %p148, %p149
    %p151 = scmp.ne.s32.totalorder %s142, %s143
    %p152 = scmp.eq.s32.totalorder %s22, 0
    %p153 = por %p151, %p152
    %p154 = scmp.ne.s32.totalorder %s142, %s143
    %p155 = scmp.eq.s32.totalorder %s23, 2
    %p156 = por %p154, %p155
    %p158 = scmp.ne.s32.totalorder %s143, %s157
    %p159 = scmp.eq.s32.totalorder %s23, 0
    %p160 = por %p158, %p159
    %s162 = sadd.s32 %s161, 1
    %p165 = scmp.eq.s32.totalorder %s17, 2
    %p166 = scmp.ne.s32.totalorder %s161, %s163
    %p167 = scmp.eq.s32.totalorder %s17, 0
    %p168 = por %p166, %p167
    %p169 = scmp.ne.s32.totalorder %s161, %s163
    %p170 = scmp.eq.s32.totalorder %s22, 2
    %p171 = por %p169, %p170
    %p172 = scmp.ne.s32.totalorder %s163, %s164
    %p173 = scmp.eq.s32.totalorder %s22, 0
    %p174 = por %p172, %p173
    %p175 = scmp.ne.s32.totalorder %s163, %s164
    %p176 = scmp.eq.s32.totalorder %s23, 2
    %p177 = por %p175, %p176
    %p179 = scmp.ne.s32.totalorder %s164, %s178
    %p180 = scmp.eq.s32.totalorder %s23, 0
    %p181 = por %p179, %p180
    %s183 = sadd.s32 %s182, 1
    %p186 = scmp.eq.s32.totalorder %s17, 2
    %p187 = scmp.ne.s32.totalorder %s182, %s184
    %p188 = scmp.eq.s32.totalorder %s17, 0
    %p189 = por %p187, %p188
    %p190 = scmp.ne.s32.totalorder %s182, %s184
    %p191 = scmp.eq.s32.totalorder %s22, 2
    %p192 = por %p190, %p191
    %p193 = scmp.ne.s32.totalorder %s184, %s185
    %p194 = scmp.eq.s32.totalorder %s22, 0
    %p195 = por %p193, %p194
    %p196 = scmp.ne.s32.totalorder %s184, %s185
    %p197 = scmp.eq.s32.totalorder %s23, 2
    %p198 = por %p196, %p197
    %p200 = scmp.ne.s32.totalorder %s185, %s199
    %p201 = scmp.eq.s32.totalorder %s23, 0
    %p202 = por %p200, %p201
    %s204 = sadd.s32 %s203, 1
    %p207 = scmp.eq.s32.totalorder %s17, 2
    %p208 = scmp.ne.s32.totalorder %s203, %s205
    %p209 = scmp.eq.s32.totalorder %s17, 0
    %p210 = por %p208, %p209
    %p211 = scmp.ne.s32.totalorder %s203, %s205
    %p212 = scmp.eq.s32.totalorder %s22, 2
    %p213 = por %p211, %p212
    %p214 = scmp.ne.s32.totalorder %s205, %s206
    %p215 = scmp.eq.s32.totalorder %s22, 0
    %p216 = por %p214, %p215
    %p217 = scmp.ne.s32.totalorder %s205, %s206
    %p218 = scmp.eq.s32.totalorder %s23, 2
    %p219 = por %p217, %p218
    %p221 = scmp.ne.s32.totalorder %s206, %s220
    %p222 = scmp.eq.s32.totalorder %s23, 0
    %p223 = por %p221, %p222
    %s225 = sadd.s32 %s224, 1
    %p228 = scmp.eq.s32.totalorder %s17, 2
    %p229 = scmp.ne.s32.totalorder %s224, %s226
    %p230 = scmp.eq.s32.totalorder %s17, 0
    %p231 = por %p229, %p230
    %p232 = scmp.ne.s32.totalorder %s224, %s226
    %p233 = scmp.eq.s32.totalorder %s22, 2
    %p234 = por %p232, %p233
    %p235 = scmp.ne.s32.totalorder %s226, %s227
    %p236 = scmp.eq.s32.totalorder %s22, 0
    %p237 = por %p235, %p236
    %p238 = scmp.ne.s32.totalorder %s226, %s227
    %p239 = scmp.eq.s32.totalorder %s23, 2
    %p240 = por %p238, %p239
    %p242 = scmp.ne.s32.totalorder %s227, %s241
    %p243 = scmp.eq.s32.totalorder %s23, 0
    %p244 = por %p242, %p243
    %s246 = sadd.s32 %s245, 1
    %p249 = scmp.eq.s32.totalorder %s17, 2
    %p250 = scmp.ne.s32.totalorder %s245, %s247
    %p251 = scmp.eq.s32.totalorder %s17, 0
    %p252 = por %p250, %p251
    %p253 = scmp.ne.s32.totalorder %s245, %s247
    %p254 = scmp.eq.s32.totalorder %s22, 2
    %p255 = por %p253, %p254
    %p256 = scmp.ne.s32.totalorder %s247, %s248
    %p257 = scmp.eq.s32.totalorder %s22, 0
    %p258 = por %p256, %p257
    %p259 = scmp.ne.s32.totalorder %s247, %s248
    %p260 = scmp.eq.s32.totalorder %s23, 2
    %p261 = por %p259, %p260
    %p263 = scmp.ne.s32.totalorder %s248, %s262
    %p264 = scmp.eq.s32.totalorder %s23, 0
    %p265 = por %p263, %p264
    %s266 = ssub.s32 %s17, %s24
    %p267 = scmp.eq.s32.totalorder %s266, 0
    %s269 = sadd.s32 %s268, 1
    %s270 = scalar_select %p267, %s268, %s269
    %p273 = pneg %p267
    %p274 = scmp.eq.s32.totalorder %s17, 2
    %p275 = por %p273, %p274
    %p276 = scmp.ne.s32.totalorder %s268, %s271
    %p277 = scmp.eq.s32.totalorder %s17, 0
    %p278 = por %p276, %p277
    %p279 = scmp.ne.s32.totalorder %s268, %s271
    %p280 = scmp.eq.s32.totalorder %s22, 2
    %p281 = por %p279, %p280
    %p282 = scmp.ne.s32.totalorder %s271, %s272
    %p283 = scmp.eq.s32.totalorder %s22, 0
    %p284 = por %p282, %p283
    %p285 = scmp.ne.s32.totalorder %s271, %s272
    %p286 = scmp.eq.s32.totalorder %s23, 2
    %p287 = por %p285, %p286
    %p289 = scmp.ne.s32.totalorder %s272, %s288
    %p290 = scmp.eq.s32.totalorder %s23, 0
    %p291 = por %p289, %p290
    %p292 = scmp.le.s32.totalorder 1, %s17
    %p293 = scmp.lt.s32.totalorder %s17, 4
    %p294 = pnand %p292, %p293
    %p295 = pneg %p294
    // Predicated region
    $region9: #{fcn_forward.7} parent=5 // pred_check
      _
    $region10: #{fcn_forward.7} parent=5 // pred_check_branch
      %297 = sbr.rel (%p294) target = $region12
    $region11: #{fcn_forward.7} parent=5 // pred_region
      %s298 = ssub.s32 %s17, 1
      // Predicated region
      $region13: #{fcn_forward.7} parent=11 // pred_check
        %p299 = pneg %p64
      $region14: #{fcn_forward.7} parent=11 // pred_check_branch
        %301 = sbr.rel (%p299) target = $region16
      $region15: #{fcn_forward.7} parent=11 // pred_region
        _
      $region16: #{fcn_forward.7} parent=11 // pred_fallthru
        _
      // Predicated region
      $region17: #{fcn_forward.7} parent=11 // pred_check
        %p302 = pneg %p85
      $region18: #{fcn_forward.7} parent=11 // pred_check_branch
        %304 = sbr.rel (%p302) target = $region20
      $region19: #{fcn_forward.7} parent=11 // pred_region
        _
      $region20: #{fcn_forward.7} parent=11 // pred_fallthru
        _
      // Predicated region
      $region21: #{fcn_forward.7} parent=11 // pred_check
        %p305 = pneg %p132
      $region22: #{fcn_forward.7} parent=11 // pred_check_branch
        %307 = sbr.rel (%p305) target = $region24
      $region23: #{fcn_forward.7} parent=11 // pred_region
        _
      $region24: #{fcn_forward.7} parent=11 // pred_fallthru
        _
      // Predicated region
      $region25: #{fcn_forward.7} parent=11 // pred_check
        %p308 = pneg %p153
      $region26: #{fcn_forward.7} parent=11 // pred_check_branch
        %310 = sbr.rel (%p308) target = $region28
      $region27: #{fcn_forward.7} parent=11 // pred_region
        _
      $region28: #{fcn_forward.7} parent=11 // pred_fallthru
        _
      // Predicated region
      $region29: #{fcn_forward.7} parent=11 // pred_check
        %p311 = pneg %p174
      $region30: #{fcn_forward.7} parent=11 // pred_check_branch
        %313 = sbr.rel (%p311) target = $region32
      $region31: #{fcn_forward.7} parent=11 // pred_region
        _
      $region32: #{fcn_forward.7} parent=11 // pred_fallthru
        _
      // Predicated region
      $region33: #{fcn_forward.7} parent=11 // pred_check
        %p314 = pneg %p195
      $region34: #{fcn_forward.7} parent=11 // pred_check_branch
        %316 = sbr.rel (%p314) target = $region36
      $region35: #{fcn_forward.7} parent=11 // pred_region
        _
      $region36: #{fcn_forward.7} parent=11 // pred_fallthru
        _
      // Predicated region
      $region37: #{fcn_forward.7} parent=11 // pred_check
        %p317 = pneg %p216
      $region38: #{fcn_forward.7} parent=11 // pred_check_branch
        %319 = sbr.rel (%p317) target = $region40
      $region39: #{fcn_forward.7} parent=11 // pred_region
        _
      $region40: #{fcn_forward.7} parent=11 // pred_fallthru
        _
      // Predicated region
      $region41: #{fcn_forward.7} parent=11 // pred_check
        %p320 = pneg %p237
      $region42: #{fcn_forward.7} parent=11 // pred_check_branch
        %322 = sbr.rel (%p320) target = $region44
      $region43: #{fcn_forward.7} parent=11 // pred_region
        _
      $region44: #{fcn_forward.7} parent=11 // pred_fallthru
        _
      // Predicated region
      $region45: #{fcn_forward.7} parent=11 // pred_check
        %p323 = pneg %p258
      $region46: #{fcn_forward.7} parent=11 // pred_check_branch
        %325 = sbr.rel (%p323) target = $region48
      $region47: #{fcn_forward.7} parent=11 // pred_region
        _
      $region48: #{fcn_forward.7} parent=11 // pred_fallthru
        _
    $region12: #{fcn_forward.7} parent=5 // pred_fallthru
      _
    %p326 = scmp.lt.s32.totalorder %s17, 3
    // Predicated region
    $region49: #{fcn_forward.7} parent=5 // pred_check
      %p327 = pneg %p326
    $region50: #{fcn_forward.7} parent=5 // pred_check_branch
      %329 = sbr.rel (%p327) target = $region52
    $region51: #{fcn_forward.7} parent=5 // pred_region
      // Predicated region
      $region53: #{fcn_forward.7} parent=51 // pred_check
        %p330 = pneg %p37
      $region54: #{fcn_forward.7} parent=51 // pred_check_branch
        %332 = sbr.rel (%p330) target = $region56
      $region55: #{fcn_forward.7} parent=51 // pred_region
        %s333 = smul.u32 2, %s17
        %p334 = scmp.lt.s32.totalorder %s333, 5
        %s335 = scalar_select %p334, %s333, 5
        %s336 = smul.addr %s335, 8
        %s337 = scalar_lea.vmem %s0, %s336
        %s338 = smul.u32 2, %s17
      $region56: #{fcn_forward.7} parent=51 // pred_fallthru
        _
      // Predicated region
      $region57: #{fcn_forward.7} parent=51 // pred_check
        %p339 = pneg %p105
      $region58: #{fcn_forward.7} parent=51 // pred_check_branch
        %341 = sbr.rel (%p339) target = $region60
      $region59: #{fcn_forward.7} parent=51 // pred_region
        %s342 = smul.u32 2, %s17
        %p343 = scmp.lt.s32.totalorder %s342, 5
        %s344 = scalar_select %p343, %s342, 5
        %s345 = smul.addr %s344, 8
        %s346 = scalar_lea.vmem %s3, %s345
        %s347 = smul.u32 2, %s17
      $region60: #{fcn_forward.7} parent=51 // pred_fallthru
        _
    $region52: #{fcn_forward.7} parent=5 // pred_fallthru
      _
    %p348 = scmp.le.s32.totalorder 1, %s17
    %p349 = scmp.lt.s32.totalorder %s17, 4
    %p350 = pnand %p348, %p349
    %p351 = pneg %p350
    // Predicated region
    $region61: #{fcn_forward.7} parent=5 // pred_check
      _
    $region62: #{fcn_forward.7} parent=5 // pred_check_branch
      %353 = sbr.rel (%p350) target = $region64
    $region63: #{fcn_forward.7} parent=5 // pred_region
      %s354 = ssub.s32 %s17, 1
      %s355 = smul.u32 2, %s22
      %p356 = scmp.lt.s32.totalorder %s355, 5
      %s357 = scalar_select %p356, %s355, 5
      %s358 = smul.addr %s357, 8
      %s359 = scalar_lea.vmem %s0, %s358
      %p360 = pneg %p43
      %p361 = pneg %p40
      %p362 = pneg %p64
      %p363 = pneg %p61
      %p364 = pneg %p85
      %p365 = pneg %p82
      %s366 = smul.u32 2, %s22
      %p367 = scmp.lt.s32.totalorder %s366, 5
      %s368 = scalar_select %p367, %s366, 5
      %s369 = smul.addr %s368, 8
      %s370 = scalar_lea.vmem %s3, %s369
      %p371 = pneg %p111
      %p372 = pneg %p108
      %p373 = pneg %p132
      %p374 = pneg %p129
      %p375 = pneg %p153
      %p376 = pneg %p150
      %p377 = pneg %p174
      %p378 = pneg %p171
      %p379 = pneg %p195
      %p380 = pneg %p192
      %p381 = pneg %p216
      %p382 = pneg %p213
      %p383 = pneg %p237
      %p384 = pneg %p234
      %p385 = pneg %p258
      %p386 = pneg %p255
      %p387 = pneg %p284
      %p388 = pneg %p281
      %s389 = smul.u32 2, %s22
      %p390 = scmp.lt.s32.totalorder %s389, 5
      %s391 = scalar_select %p390, %s389, 5
      %s392 = smul.addr %s391, 8
      %s393 = scalar_lea.vmem %s11, %s392
      %s394 = smul.u32 2, %s22
      %p395 = scmp.lt.s32.totalorder %s394, 5
      %s396 = scalar_select %p395, %s394, 5
      %s397 = smul.addr %s396, 8
      %s398 = scalar_lea.vmem %s0, %s397
      %s399 = smul.u32 2, %s22
      %s400 = smul.u32 2, %s22
      %p401 = scmp.lt.s32.totalorder %s400, 5
      %s402 = scalar_select %p401, %s400, 5
      %s403 = smul.addr %s402, 8
      %s404 = scalar_lea.vmem %s3, %s403
      %s405 = smul.u32 2, %s22
      %s406 = smul.u32 2, %s22
      %p407 = scmp.lt.s32.totalorder %s406, 5
      %s408 = scalar_select %p407, %s406, 5
      %s409 = smul.addr %s408, 8
      %s410 = scalar_lea.vmem %s11, %s409
      %s411 = smul.u32 2, %s22
      %v412 = vld [vmem:[%s398] sm:$0xff]
      %v413 = vld [vmem:[%s398 + $0x8] sm:$0xff]
      %v414 = vld [vmem:[%s1] sm:$0x1]
      %v416 = vlaneseq
      %v417 = vshrl.u32 %v416, 7
      %v418 = vsub.s32 0, %v417
      %v419 = vrot.slane %v414, %v418
      %v421 = vmul.f32 %v412, %v419
      %v422 = vmul.f32 %v413, %v419
      %v423 = vld [vmem:[%s2] sm:$0x1]
      %v425 = vlaneseq
      %v426 = vshrl.u32 %v425, 7
      %v427 = vsub.s32 0, %v426
      %v428 = vrot.slane %v423, %v427
      %v430 = vadd.f32 %v421, %v428
      %v431 = vadd.f32 %v422, %v428
      %v432 = vmax.f32 %v430, 0.0
      %v433 = vmax.f32 %v431, 0.0
      %v434 = vld [vmem:[%s4] sm:$0xff]
      %v435 = vld [vmem:[%s4 + $0x8] sm:$0xff]
      %v436 = vld [vmem:[%s4 + $0x10] sm:$0xff]
      %v437 = vld [vmem:[%s4 + $0x18] sm:$0xff]
      %v438 = vld [vmem:[%s4 + $0x20] sm:$0xff]
      %v439 = vld [vmem:[%s4 + $0x28] sm:$0xff]
      %v440 = vld [vmem:[%s4 + $0x30] sm:$0xff]
      %v441 = vld [vmem:[%s4 + $0x38] sm:$0xff]
      %v442 = vld [vmem:[%s4 + $0x40] sm:$0xff]
      %v443 = vld [vmem:[%s4 + $0x48] sm:$0xff]
      %v444 = vld [vmem:[%s4 + $0x50] sm:$0xff]
      %v445 = vld [vmem:[%s4 + $0x58] sm:$0xff]
      %v446 = vld [vmem:[%s4 + $0x60] sm:$0xff]
      %v447 = vld [vmem:[%s4 + $0x68] sm:$0xff]
      %v448 = vld [vmem:[%s4 + $0x70] sm:$0xff]
      %v449 = vld [vmem:[%s4 + $0x78] sm:$0xff]
      %v450 = vld [vmem:[%s5] sm:$0x1]
      %v452 = vlaneseq
      %v453 = vshrl.u32 %v452, 7
      %v454 = vsub.s32 0, %v453
      %v455 = vrot.slane %v450, %v454
      %457 = vmatprep.subr.mxu0 0.0
      %458 = vmatpush1.msra.mxu0 %v434
      %459 = vmatprep.subr.mxu0 0.0
      %460 = vmatpush1.msra.mxu0 %v435
      %461 = vmatprep.subr.mxu0 0.0
      %462 = vmatpush1.msra.mxu0 %v436
      %463 = vmatprep.subr.mxu0 0.0
      %464 = vmatpush1.msra.mxu0 %v437
      %465 = vmatprep.subr.mxu0 0.0
      %466 = vmatpush1.msra.mxu0 %v438
      %467 = vmatprep.subr.mxu0 0.0
      %468 = vmatpush1.msra.mxu0 %v439
      %469 = vmatprep.subr.mxu0 0.0
      %470 = vmatpush1.msra.mxu0 %v440
      %471 = vmatprep.subr.mxu0 0.0
      %472 = vmatpush1.msra.mxu0 %v441
      %473 = vmatprep.subr.mxu0 0.0
      %474 = vmatpush1.msra.mxu0 %v442
      %475 = vmatprep.subr.mxu0 0.0
      %476 = vmatpush1.msra.mxu0 %v443
      %477 = vmatprep.subr.mxu0 0.0
      %478 = vmatpush1.msra.mxu0 %v444
      %479 = vmatprep.subr.mxu0 0.0
      %480 = vmatpush1.msra.mxu0 %v445
      %481 = vmatprep.subr.mxu0 0.0
      %482 = vmatpush1.msra.mxu0 %v446
      %483 = vmatprep.subr.mxu0 0.0
      %484 = vmatpush1.msra.mxu0 %v447
      %485 = vmatprep.subr.mxu0 0.0
      %486 = vmatpush1.msra.mxu0 %v448
      %487 = vmatprep.subr.mxu0 0.0
      %488 = vmatpush1.msra.mxu0 %v449
      %489 = vmatprep.subr.mxu0 0.0
      %490 = vmatpush1.msra.mxu0 0.0
      %491 = vmatprep.subr.mxu0 0.0
      %492 = vmatpush1.msra.mxu0 0.0
      %493 = vmatprep.subr.mxu0 0.0
      %494 = vmatpush1.msra.mxu0 0.0
      %495 = vmatprep.subr.mxu0 0.0
      %496 = vmatpush1.msra.mxu0 0.0
      %497 = vmatprep.subr.mxu0 0.0
      %498 = vmatpush1.msra.mxu0 0.0
      %499 = vmatprep.subr.mxu0 0.0
      %500 = vmatpush1.msra.mxu0 0.0
      %501 = vmatprep.subr.mxu0 0.0
      %502 = vmatpush1.msra.mxu0 0.0
      %503 = vmatprep.subr.mxu0 0.0
      %504 = vmatpush1.msra.mxu0 0.0
      %505 = vmatprep.subr.mxu0 0.0
      %506 = vmatpush1.msra.mxu0 0.0
      %507 = vmatprep.subr.mxu0 0.0
      %508 = vmatpush1.msra.mxu0 0.0
      %509 = vmatprep.subr.mxu0 0.0
      %510 = vmatpush1.msra.mxu0 0.0
      %511 = vmatprep.subr.mxu0 0.0
      %512 = vmatpush1.msra.mxu0 0.0
      %513 = vmatprep.subr.mxu0 0.0
      %514 = vmatpush1.msra.mxu0 0.0
      %515 = vmatprep.subr.mxu0 0.0
      %516 = vmatpush1.msra.mxu0 0.0
      %517 = vmatprep.subr.mxu0 0.0
      %518 = vmatpush1.msra.mxu0 0.0
      %519 = vmatprep.subr.mxu0 0.0
      %520 = vmatpush1.msra.mxu0 0.0
      %521 = vmatprep.mubr.f32.mxu0 0.0
      %522 = vmatmul.mubr.f32.gmra.mrb[0].mxu0 %v432
      %v523 = vpop.f32.mrb[0].mxu0
      %v524 = vadd.f32 %v455, %v523
      %v525 = vpop.f32.mrb[0].mxu0
      %526 = vmatprep.mubr.f32.mxu0 0.0
      %527 = vmatmul.mubr.f32.gmra.mrb[0].mxu0 %v433
      %v528 = vpop.f32.mrb[0].mxu0
      %v529 = vadd.f32 %v455, %v528
      %v530 = vpop.f32.mrb[0].mxu0
      %531 = vdwg.mxu0
      %v532 = vld [vmem:[%s404] sm:$0xff]
      %v533 = vld [vmem:[%s404 + $0x8] sm:$0xff]
      %v534 = vld [vmem:[%s6] sm:$0xff]
      %v535 = vld [vmem:[%s6 + $0x8] sm:$0xff]
      %v536 = vld [vmem:[%s6 + $0x10] sm:$0xff]
      %v537 = vld [vmem:[%s6 + $0x18] sm:$0xff]
      %v538 = vld [vmem:[%s6 + $0x20] sm:$0xff]
      %v539 = vld [vmem:[%s6 + $0x28] sm:$0xff]
      %v540 = vld [vmem:[%s6 + $0x30] sm:$0xff]
      %v541 = vld [vmem:[%s6 + $0x38] sm:$0xff]
      %v542 = vld [vmem:[%s6 + $0x40] sm:$0xff]
      %v543 = vld [vmem:[%s6 + $0x48] sm:$0xff]
      %v544 = vld [vmem:[%s6 + $0x50] sm:$0xff]
      %v545 = vld [vmem:[%s6 + $0x58] sm:$0xff]
      %v546 = vld [vmem:[%s6 + $0x60] sm:$0xff]
      %v547 = vld [vmem:[%s6 + $0x68] sm:$0xff]
      %v548 = vld [vmem:[%s6 + $0x70] sm:$0xff]
      %v549 = vld [vmem:[%s6 + $0x78] sm:$0xff]
      %v550 = vld [vmem:[%s7] sm:$0xff]
      %v551 = vld [vmem:[%s7 + $0x8] sm:$0xff]
      %v552 = vld [vmem:[%s7 + $0x10] sm:$0xff]
      %v553 = vld [vmem:[%s7 + $0x18] sm:$0xff]
      %v554 = vld [vmem:[%s7 + $0x20] sm:$0xff]
      %v555 = vld [vmem:[%s7 + $0x28] sm:$0xff]
      %v556 = vld [vmem:[%s7 + $0x30] sm:$0xff]
      %v557 = vld [vmem:[%s7 + $0x38] sm:$0xff]
      %v558 = vld [vmem:[%s7 + $0x40] sm:$0xff]
      %v559 = vld [vmem:[%s7 + $0x48] sm:$0xff]
      %v560 = vld [vmem:[%s7 + $0x50] sm:$0xff]
      %v561 = vld [vmem:[%s7 + $0x58] sm:$0xff]
      %v562 = vld [vmem:[%s7 + $0x60] sm:$0xff]
      %v563 = vld [vmem:[%s7 + $0x68] sm:$0xff]
      %v564 = vld [vmem:[%s7 + $0x70] sm:$0xff]
      %v565 = vld [vmem:[%s7 + $0x78] sm:$0xff]
      %566 = vmatprep.subr.mxu0 0.0
      %567 = vmatpush1.msra.mxu0 %v550
      %568 = vmatprep.subr.mxu0 0.0
      %569 = vmatpush1.msra.mxu0 %v551
      %570 = vmatprep.subr.mxu0 0.0
      %571 = vmatpush1.msra.mxu0 %v552
      %572 = vmatprep.subr.mxu0 0.0
      %573 = vmatpush1.msra.mxu0 %v553
      %574 = vmatprep.subr.mxu0 0.0
      %575 = vmatpush1.msra.mxu0 %v554
      %576 = vmatprep.subr.mxu0 0.0
      %577 = vmatpush1.msra.mxu0 %v555
      %578 = vmatprep.subr.mxu0 0.0
      %579 = vmatpush1.msra.mxu0 %v556
      %580 = vmatprep.subr.mxu0 0.0
      %581 = vmatpush1.msra.mxu0 %v557
      %582 = vmatprep.subr.mxu0 0.0
      %583 = vmatpush1.msra.mxu0 %v558
      %584 = vmatprep.subr.mxu0 0.0
      %585 = vmatpush1.msra.mxu0 %v559
      %586 = vmatprep.subr.mxu0 0.0
      %587 = vmatpush1.msra.mxu0 %v560
      %588 = vmatprep.subr.mxu0 0.0
      %589 = vmatpush1.msra.mxu0 %v561
      %590 = vmatprep.subr.mxu0 0.0
      %591 = vmatpush1.msra.mxu0 %v562
      %592 = vmatprep.subr.mxu0 0.0
      %593 = vmatpush1.msra.mxu0 %v563
      %594 = vmatprep.subr.mxu0 0.0
      %595 = vmatpush1.msra.mxu0 %v564
      %596 = vmatprep.subr.mxu0 0.0
      %597 = vmatpush1.msra.mxu0 %v565
      %598 = vmatprep.subr.mxu0 0.0
      %599 = vmatpush1.msra.mxu0 0.0
      %600 = vmatprep.subr.mxu0 0.0
      %601 = vmatpush1.msra.mxu0 0.0
      %602 = vmatprep.subr.mxu0 0.0
      %603 = vmatpush1.msra.mxu0 0.0
      %604 = vmatprep.subr.mxu0 0.0
      %605 = vmatpush1.msra.mxu0 0.0
      %606 = vmatprep.subr.mxu0 0.0
      %607 = vmatpush1.msra.mxu0 0.0
      %608 = vmatprep.subr.mxu0 0.0
      %609 = vmatpush1.msra.mxu0 0.0
      %610 = vmatprep.subr.mxu0 0.0
      %611 = vmatpush1.msra.mxu0 0.0
      %612 = vmatprep.subr.mxu0 0.0
      %613 = vmatpush1.msra.mxu0 0.0
      %614 = vmatprep.subr.mxu0 0.0
      %615 = vmatpush1.msra.mxu0 0.0
      %616 = vmatprep.subr.mxu0 0.0
      %617 = vmatpush1.msra.mxu0 0.0
      %618 = vmatprep.subr.mxu0 0.0
      %619 = vmatpush1.msra.mxu0 0.0
      %620 = vmatprep.subr.mxu0 0.0
      %621 = vmatpush1.msra.mxu0 0.0
      %622 = vmatprep.subr.mxu0 0.0
      %623 = vmatpush1.msra.mxu0 0.0
      %624 = vmatprep.subr.mxu0 0.0
      %625 = vmatpush1.msra.mxu0 0.0
      %626 = vmatprep.subr.mxu0 0.0
      %627 = vmatpush1.msra.mxu0 0.0
      %628 = vmatprep.subr.mxu0 0.0
      %629 = vmatpush1.msra.mxu0 0.0
      %630 = vmatprep.mubr.f32.mxu0 0.0
      %631 = vmatmul.mubr.f32.gmra.mrb[0].mxu0 %v524
      %v632 = vpop.f32.mrb[0].mxu0
      %v633 = vadd.f32 0.0, %v632
      %v634 = vpop.f32.mrb[0].mxu0
      %635 = vmatprep.mubr.f32.mxu0 0.0
      %636 = vmatmul.mubr.f32.gmra.mrb[0].mxu0 %v529
      %v637 = vpop.f32.mrb[0].mxu0
      %v638 = vadd.f32 0.0, %v637
      %v639 = vpop.f32.mrb[0].mxu0
      %640 = vdwg.mxu0
      %641 = vmatprep.subr.mxu0 0.0
      %642 = vmatpush1.msra.mxu0 %v534
      %643 = vmatprep.subr.mxu0 0.0
      %644 = vmatpush1.msra.mxu0 %v535
      %645 = vmatprep.subr.mxu0 0.0
      %646 = vmatpush1.msra.mxu0 %v536
      %647 = vmatprep.subr.mxu0 0.0
      %648 = vmatpush1.msra.mxu0 %v537
      %649 = vmatprep.subr.mxu0 0.0
      %650 = vmatpush1.msra.mxu0 %v538
      %651 = vmatprep.subr.mxu0 0.0
      %652 = vmatpush1.msra.mxu0 %v539
      %653 = vmatprep.subr.mxu0 0.0
      %654 = vmatpush1.msra.mxu0 %v540
      %655 = vmatprep.subr.mxu0 0.0
      %656 = vmatpush1.msra.mxu0 %v541
      %657 = vmatprep.subr.mxu0 0.0
      %658 = vmatpush1.msra.mxu0 %v542
      %659 = vmatprep.subr.mxu0 0.0
      %660 = vmatpush1.msra.mxu0 %v543
      %661 = vmatprep.subr.mxu0 0.0
      %662 = vmatpush1.msra.mxu0 %v544
      %663 = vmatprep.subr.mxu0 0.0
      %664 = vmatpush1.msra.mxu0 %v545
      %665 = vmatprep.subr.mxu0 0.0
      %666 = vmatpush1.msra.mxu0 %v546
      %667 = vmatprep.subr.mxu0 0.0
      %668 = vmatpush1.msra.mxu0 %v547
      %669 = vmatprep.subr.mxu0 0.0
      %670 = vmatpush1.msra.mxu0 %v548
      %671 = vmatprep.subr.mxu0 0.0
      %672 = vmatpush1.msra.mxu0 %v549
      %673 = vmatprep.subr.mxu0 0.0
      %674 = vmatpush1.msra.mxu0 0.0
      %675 = vmatprep.subr.mxu0 0.0
      %676 = vmatpush1.msra.mxu0 0.0
      %677 = vmatprep.subr.mxu0 0.0
      %678 = vmatpush1.msra.mxu0 0.0
      %679 = vmatprep.subr.mxu0 0.0
      %680 = vmatpush1.msra.mxu0 0.0
      %681 = vmatprep.subr.mxu0 0.0
      %682 = vmatpush1.msra.mxu0 0.0
      %683 = vmatprep.subr.mxu0 0.0
      %684 = vmatpush1.msra.mxu0 0.0
      %685 = vmatprep.subr.mxu0 0.0
      %686 = vmatpush1.msra.mxu0 0.0
      %687 = vmatprep.subr.mxu0 0.0
      %688 = vmatpush1.msra.mxu0 0.0
      %689 = vmatprep.subr.mxu0 0.0
      %690 = vmatpush1.msra.mxu0 0.0
      %691 = vmatprep.subr.mxu0 0.0
      %692 = vmatpush1.msra.mxu0 0.0
      %693 = vmatprep.subr.mxu0 0.0
      %694 = vmatpush1.msra.mxu0 0.0
      %695 = vmatprep.subr.mxu0 0.0
      %696 = vmatpush1.msra.mxu0 0.0
      %697 = vmatprep.subr.mxu0 0.0
      %698 = vmatpush1.msra.mxu0 0.0
      %699 = vmatprep.subr.mxu0 0.0
      %700 = vmatpush1.msra.mxu0 0.0
      %701 = vmatprep.subr.mxu0 0.0
      %702 = vmatpush1.msra.mxu0 0.0
      %703 = vmatprep.subr.mxu0 0.0
      %704 = vmatpush1.msra.mxu0 0.0
      %705 = vmatprep.mubr.f32.mxu0 0.0
      %706 = vmatmul.mubr.f32.gmra.mrb[0].mxu0 %v532
      %v707 = vpop.f32.mrb[0].mxu0
      %v708 = vadd.f32 %v633, %v707
      %v709 = vpop.f32.mrb[0].mxu0
      %710 = vmatprep.mubr.f32.mxu0 0.0
      %711 = vmatmul.mubr.f32.gmra.mrb[0].mxu0 %v533
      %v712 = vpop.f32.mrb[0].mxu0
      %v713 = vadd.f32 %v638, %v712
      %v714 = vpop.f32.mrb[0].mxu0
      %715 = vdwg.mxu0
      %v716 = vld [vmem:[%s8] sm:$0x1]
      %v718 = vlaneseq
      %v719 = vshrl.u32 %v718, 7
      %v720 = vsub.s32 0, %v719
      %v721 = vrot.slane %v716, %v720
      %v723 = vadd.f32 %v708, %v721
      %v724 = vadd.f32 %v713, %v721
      %v725 = vmax.f32 %v723, 0.0
      %v726 = vmax.f32 %v724, 0.0
      %v727 = vld [vmem:[%s9] sm:$0xff]
      %v728 = vld [vmem:[%s9 + $0x8] sm:$0xff]
      %v729 = vld [vmem:[%s9 + $0x10] sm:$0xff]
      %v730 = vld [vmem:[%s9 + $0x18] sm:$0xff]
      %v731 = vld [vmem:[%s9 + $0x20] sm:$0xff]
      %v732 = vld [vmem:[%s9 + $0x28] sm:$0xff]
      %v733 = vld [vmem:[%s9 + $0x30] sm:$0xff]
      %v734 = vld [vmem:[%s9 + $0x38] sm:$0xff]
      %v735 = vld [vmem:[%s9 + $0x40] sm:$0xff]
      %v736 = vld [vmem:[%s9 + $0x48] sm:$0xff]
      %v737 = vld [vmem:[%s9 + $0x50] sm:$0xff]
      %v738 = vld [vmem:[%s9 + $0x58] sm:$0xff]
      %v739 = vld [vmem:[%s9 + $0x60] sm:$0xff]
      %v740 = vld [vmem:[%s9 + $0x68] sm:$0xff]
      %v741 = vld [vmem:[%s9 + $0x70] sm:$0xff]
      %v742 = vld [vmem:[%s9 + $0x78] sm:$0xff]
      %v743 = vld [vmem:[%s10] sm:$0x1]
      %v745 = vlaneseq
      %v746 = vshrl.u32 %v745, 7
      %v747 = vsub.s32 0, %v746
      %v748 = vrot.slane %v743, %v747
      %750 = vmatprep.subr.mxu0 0.0
      %751 = vmatpush1.msra.mxu0 %v727
      %752 = vmatprep.subr.mxu0 0.0
      %753 = vmatpush1.msra.mxu0 %v728
      %754 = vmatprep.subr.mxu0 0.0
      %755 = vmatpush1.msra.mxu0 %v729
      %756 = vmatprep.subr.mxu0 0.0
      %757 = vmatpush1.msra.mxu0 %v730
      %758 = vmatprep.subr.mxu0 0.0
      %759 = vmatpush1.msra.mxu0 %v731
      %760 = vmatprep.subr.mxu0 0.0
      %761 = vmatpush1.msra.mxu0 %v732
      %762 = vmatprep.subr.mxu0 0.0
      %763 = vmatpush1.msra.mxu0 %v733
      %764 = vmatprep.subr.mxu0 0.0
      %765 = vmatpush1.msra.mxu0 %v734
      %766 = vmatprep.subr.mxu0 0.0
      %767 = vmatpush1.msra.mxu0 %v735
      %768 = vmatprep.subr.mxu0 0.0
      %769 = vmatpush1.msra.mxu0 %v736
      %770 = vmatprep.subr.mxu0 0.0
      %771 = vmatpush1.msra.mxu0 %v737
      %772 = vmatprep.subr.mxu0 0.0
      %773 = vmatpush1.msra.mxu0 %v738
      %774 = vmatprep.subr.mxu0 0.0
      %775 = vmatpush1.msra.mxu0 %v739
      %776 = vmatprep.subr.mxu0 0.0
      %777 = vmatpush1.msra.mxu0 %v740
      %778 = vmatprep.subr.mxu0 0.0
      %779 = vmatpush1.msra.mxu0 %v741
      %780 = vmatprep.subr.mxu0 0.0
      %781 = vmatpush1.msra.mxu0 %v742
      %782 = vmatprep.subr.mxu0 0.0
      %783 = vmatpush1.msra.mxu0 0.0
      %784 = vmatprep.subr.mxu0 0.0
      %785 = vmatpush1.msra.mxu0 0.0
      %786 = vmatprep.subr.mxu0 0.0
      %787 = vmatpush1.msra.mxu0 0.0
      %788 = vmatprep.subr.mxu0 0.0
      %789 = vmatpush1.msra.mxu0 0.0
      %790 = vmatprep.subr.mxu0 0.0
      %791 = vmatpush1.msra.mxu0 0.0
      %792 = vmatprep.subr.mxu0 0.0
      %793 = vmatpush1.msra.mxu0 0.0
      %794 = vmatprep.subr.mxu0 0.0
      %795 = vmatpush1.msra.mxu0 0.0
      %796 = vmatprep.subr.mxu0 0.0
      %797 = vmatpush1.msra.mxu0 0.0
      %798 = vmatprep.subr.mxu0 0.0
      %799 = vmatpush1.msra.mxu0 0.0
      %800 = vmatprep.subr.mxu0 0.0
      %801 = vmatpush1.msra.mxu0 0.0
      %802 = vmatprep.subr.mxu0 0.0
      %803 = vmatpush1.msra.mxu0 0.0
      %804 = vmatprep.subr.mxu0 0.0
      %805 = vmatpush1.msra.mxu0 0.0
      %806 = vmatprep.subr.mxu0 0.0
      %807 = vmatpush1.msra.mxu0 0.0
      %808 = vmatprep.subr.mxu0 0.0
      %809 = vmatpush1.msra.mxu0 0.0
      %810 = vmatprep.subr.mxu0 0.0
      %811 = vmatpush1.msra.mxu0 0.0
      %812 = vmatprep.subr.mxu0 0.0
      %813 = vmatpush1.msra.mxu0 0.0
      %814 = vmatprep.mubr.f32.mxu0 0.0
      %815 = vmatmul.mubr.f32.gmra.mrb[0].mxu0 %v725
      %v816 = vpop.f32.mrb[0].mxu0
      %v817 = vadd.f32 %v748, %v816
      %v818 = vpop.f32.mrb[0].mxu0
      %819 = vmatprep.mubr.f32.mxu0 0.0
      %820 = vmatmul.mubr.f32.gmra.mrb[0].mxu0 %v726
      %v821 = vpop.f32.mrb[0].mxu0
      %v822 = vadd.f32 %v748, %v821
      %v823 = vpop.f32.mrb[0].mxu0
      %824 = vdwg.mxu0
      %825 = vst [vmem:[%s410] sm:$0xff] %v817
      %826 = vst [vmem:[%s410 + $0x8] sm:$0xff] %v822
      %s827 = smul.u32 2, %s22
      %p828 = scmp.lt.s32.totalorder %s827, 5
      %s829 = scalar_select %p828, %s827, 5
      %s830 = smul.addr %s829, 8
      %s831 = scalar_lea.vmem %s11, %s830
      // Predicated region
      $region65: #{fcn_forward.7} parent=63 // pred_check
        %p832 = pneg %p281
      $region66: #{fcn_forward.7} parent=63 // pred_check_branch
        %834 = sbr.rel (%p832) target = $region68
      $region67: #{fcn_forward.7} parent=63 // pred_region
        %s835 = smul.u32 2, %s22
      $region68: #{fcn_forward.7} parent=63 // pred_fallthru
        _
    $region64: #{fcn_forward.7} parent=5 // pred_fallthru
      _
    %p836 = scmp.le.s32.totalorder 2, %s17
    // Predicated region
    $region69: #{fcn_forward.7} parent=5 // pred_check
      %p837 = pneg %p836
    $region70: #{fcn_forward.7} parent=5 // pred_check_branch
      %839 = sbr.rel (%p837) target = $region72
    $region71: #{fcn_forward.7} parent=5 // pred_region
      %s840 = ssub.s32 %s17, 2
      // Predicated region
      $region73: #{fcn_forward.7} parent=71 // pred_check
        %p841 = pneg %p287
      $region74: #{fcn_forward.7} parent=71 // pred_check_branch
        %843 = sbr.rel (%p841) target = $region76
      $region75: #{fcn_forward.7} parent=71 // pred_region
        %s844 = smul.u32 2, %s23
        %p845 = scmp.lt.s32.totalorder %s844, 5
        %s846 = scalar_select %p845, %s844, 5
        %s847 = smul.addr %s846, 8
        %s848 = scalar_lea.vmem %s11, %s847
      $region76: #{fcn_forward.7} parent=71 // pred_fallthru
        _
    $region72: #{fcn_forward.7} parent=5 // pred_fallthru
      _
  $region6: #{fcn_forward.7} parent=0 // loop_footer
    %s21 = sadd.s32 1, %s17
  $region7: #{fcn_forward.7} parent=0 // loop_footer_branch
    %16 = sbr.rel target = $region3
  $region8: #{fcn_forward.7} parent=0 // loop_exit
    _

</llo_original>
